<compile_context>
chip_gen: v5e
topology: v5e:2x2
jax: 0.10.0
libtpu: 0.0.40
codegen_flags: <defaults>
</compile_context>

<pallas_src>
import jax
import jax.numpy as jnp
import numpy as np
from jax.experimental import pallas as pl
from jax.experimental.pallas import tpu as pltpu

_LANES = 128        # lane width; conv Cout padded to this for lane-dense stores
_TILE_M_MAX = 512   # max rows per conv grid step (VMEM-bounded, v7x-friendly)
_TILE_B_MAX = 256   # max batch rows per MLP grid step


def _round_up(x, m):
    return (x + m - 1) // m * m


# ----------------------------------------------------------------------------
# Pallas kernels
# ----------------------------------------------------------------------------
def _conv_relu_pool_kernel(p_ref, w_ref, b_ref, o_ref):
    """Fused conv (one im2col matmul) + 2x2 max-pool + bias + ReLU.

    p_ref: (4*TM, K)  bf16 -- rows = [pool pos d=0..3] x [TM output pixels]
    w_ref: (K, 128)   bf16 -- Cout zero-padded to 128 lanes
    b_ref: (1, 128)   f32
    o_ref: (TM, 128)  bf16
    """
    tm = o_ref.shape[0]
    z = jnp.dot(p_ref[...], w_ref[...], preferred_element_type=jnp.float32)
    m = jnp.maximum(jnp.maximum(z[0 * tm:1 * tm], z[1 * tm:2 * tm]),
                    jnp.maximum(z[2 * tm:3 * tm], z[3 * tm:4 * tm]))
    # bias + ReLU hoisted out of the pool max (ReLU is monotone, bias is shared).
    o_ref[...] = jnp.maximum(m + b_ref[...], 0.0).astype(o_ref.dtype)


def _mlp_kernel(x_ref, w1_ref, b1_ref, w2_ref, b2_ref, w3_ref, b3_ref, o_ref):
    """Fused fc1(ReLU) -> fc2(ReLU) -> fc3; intermediates stay on-chip."""
    h = jnp.dot(x_ref[...], w1_ref[...], preferred_element_type=jnp.float32)
    h = jnp.maximum(h + b1_ref[...], 0.0)
    h = jnp.dot(h.astype(w2_ref.dtype), w2_ref[...],
                preferred_element_type=jnp.float32)
    h = jnp.maximum(h + b2_ref[...], 0.0)
    h = jnp.dot(h.astype(w3_ref.dtype), w3_ref[...],
                preferred_element_type=jnp.float32)
    o_ref[...] = (h + b3_ref[...]).astype(o_ref.dtype)


# ----------------------------------------------------------------------------
# pallas_call wrappers
# ----------------------------------------------------------------------------
def _conv_relu_pool(p, w_pad, b_pad, *, n_tiles, tile_m, k):
    return pl.pallas_call(
        _conv_relu_pool_kernel,
        out_shape=jax.ShapeDtypeStruct((n_tiles * tile_m, _LANES), jnp.bfloat16),
        grid=(n_tiles,),
        in_specs=[
            pl.BlockSpec((4 * tile_m, k), lambda i: (i, 0)),
            pl.BlockSpec((k, _LANES), lambda i: (0, 0)),   # weights: resident block
            pl.BlockSpec((1, _LANES), lambda i: (0, 0)),   # bias:    resident block
        ],
        out_specs=pl.BlockSpec((tile_m, _LANES), lambda i: (i, 0)),
        compiler_params=pltpu.CompilerParams(
            dimension_semantics=("parallel",)),
    )(p, w_pad, b_pad)


def _mlp(x, w1, b1, w2, b2, w3, b3, *, n_tiles, tile_b):
    d_in, d1 = w1.shape
    d2 = w2.shape[1]
    d3 = w3.shape[1]
    return pl.pallas_call(
        _mlp_kernel,
        out_shape=jax.ShapeDtypeStruct((n_tiles * tile_b, d3), jnp.float32),
        grid=(n_tiles,),
        in_specs=[
            pl.BlockSpec((tile_b, d_in), lambda i: (i, 0)),
            pl.BlockSpec((d_in, d1), lambda i: (0, 0)),
            pl.BlockSpec((1, d1), lambda i: (0, 0)),
            pl.BlockSpec((d1, d2), lambda i: (0, 0)),
            pl.BlockSpec((1, d2), lambda i: (0, 0)),
            pl.BlockSpec((d2, d3), lambda i: (0, 0)),
            pl.BlockSpec((1, d3), lambda i: (0, 0)),
        ],
        out_specs=pl.BlockSpec((tile_b, d3), lambda i: (i, 0)),
        compiler_params=pltpu.CompilerParams(
            dimension_semantics=("parallel",)),
    )(x, w1, b1, w2, b2, w3, b3)


# ----------------------------------------------------------------------------
# XLA glue: pool-grouped im2col (strided slices only) and weight reorg
# ----------------------------------------------------------------------------
def _pooled_conv_patches(x_nhwc, ksize, tile_m):
    """im2col for 'valid' conv (stride 1) fused with 2x2/stride-2 max-pool grouping.

    Returns (p, m, n_tiles, hp, wp, k) where p has shape (n_tiles*4*tile_m, k) bf16:
    rows grouped per tile as [pool pos d=0..3] x [tile_m output pixels (b, ph, pw)],
    columns ordered (kh, kw, cin).  Built from strided slices (no NCHW transposes).
    """
    b, h, w, c = x_nhwc.shape
    hp, wp = (h - ksize + 1) // 2, (w - ksize + 1) // 2
    k = ksize * ksize * c
    m = b * hp * wp
    planes = []
    for dy in range(2):
        for dx in range(2):
            cols = [x_nhwc[:, dy + kh:dy + kh + 2 * hp:2,
                              dx + kw:dx + kw + 2 * wp:2, :]
                    for kh in range(ksize) for kw in range(ksize)]
            planes.append(jnp.concatenate(cols, axis=-1).reshape(m, k))
    p4 = jnp.stack(planes, axis=0)                                  # (4, m, k)
    m_pad = _round_up(m, tile_m)
    p4 = jnp.pad(p4, ((0, 0), (0, m_pad - m), (0, 0)))
    n_tiles = m_pad // tile_m
    p = p4.reshape(4, n_tiles, tile_m, k).transpose(1, 0, 2, 3)     # tiny regroup copy
    p = p.reshape(n_tiles * 4 * tile_m, k).astype(jnp.bfloat16)
    return p, m, n_tiles, hp, wp, k


def _prep_conv_weights(w_oihw, b):
    """(Cout,Cin,kh,kw) -> (kh*kw*Cin, 128) bf16 weights + (1,128) f32 bias."""
    cout = w_oihw.shape[0]
    wm = w_oihw.transpose(2, 3, 1, 0).reshape(-1, cout)             # rows (kh,kw,cin)
    wm = jnp.pad(wm, ((0, 0), (0, _LANES - cout))).astype(jnp.bfloat16)
    bm = jnp.pad(b, (0, _LANES - cout)).reshape(1, _LANES).astype(jnp.float32)
    return wm, bm


# ----------------------------------------------------------------------------
# LeNet-5 forward (Pallas)
# ----------------------------------------------------------------------------
def lenet5_forward(x, params):
    """x: (B, 1, 28, 28) float32 (PyTorch NCHW). Returns logits (B, 10) float32."""
    (w1, b1, w2, b2, fw1, fb1, fw2, fb2, fw3, fb3) = params
    batch = x.shape[0]

    # trace-time weight reorg (tiny): conv columns (kh,kw,cin) with Cout padded to
    # 128; fc1 columns permuted from PyTorch's (c,h,w) flatten to our (h,w,c) flatten.
    w1m, b1m = _prep_conv_weights(w1, b1)                            # (25,128),(1,128)
    w2m, b2m = _prep_conv_weights(w2, b2)                            # (150,128),(1,128)
    fw1m = (fw1.reshape(120, 16, 5, 5).transpose(0, 2, 3, 1)
               .reshape(120, 400).T.astype(jnp.bfloat16))            # (400,120)
    fw2m = fw2.T.astype(jnp.bfloat16)                                # (120,84)
    fw3m = fw3.T.astype(jnp.bfloat16)                                # (84,10)
    fb1m = fb1.reshape(1, -1).astype(jnp.float32)
    fb2m = fb2.reshape(1, -1).astype(jnp.float32)
    fb3m = fb3.reshape(1, -1).astype(jnp.float32)

    # conv1: 1->6, 5x5, padding=2, ReLU, 2x2 max-pool. NHWC (C=1 so no transpose).
    x_nhwc = jnp.pad(x[:, 0], ((0, 0), (2, 2), (2, 2)))[..., None]   # (B,32,32,1)
    tm1 = min(_TILE_M_MAX, _round_up(batch * 14 * 14, 16))
    p1, m1, g1, hp1, wp1, k1 = _pooled_conv_patches(x_nhwc, 5, tm1)
    y1 = _conv_relu_pool(p1, w1m, b1m, n_tiles=g1, tile_m=tm1, k=k1)
    a1 = y1[:m1, :6].reshape(batch, hp1, wp1, 6)                     # (B,14,14,6) NHWC

    # conv2: 6->16, 5x5, valid, ReLU, 2x2 max-pool.
    tm2 = min(_TILE_M_MAX, _round_up(batch * 5 * 5, 16))
    p2, m2, g2, hp2, wp2, k2 = _pooled_conv_patches(a1, 5, tm2)
    y2 = _conv_relu_pool(p2, w2m, b2m, n_tiles=g2, tile_m=tm2, k=k2)
    a2 = y2[:m2, :16].reshape(batch, hp2 * wp2 * 16)                 # (B,400) (h,w,c)

    # fused fc1 -> fc2 -> fc3 in a single kernel.
    tb = min(_TILE_B_MAX, _round_up(batch, 8))
    b_pad = _round_up(batch, tb)
    x_fc = jnp.pad(a2, ((0, b_pad - batch), (0, 0)))
    out = _mlp(x_fc, fw1m, fb1m, fw2m, fb2m, fw3m, fb3m,
               n_tiles=b_pad // tb, tile_b=tb)
    return out[:batch]


# ----------------------------------------------------------------------------
# Pure-JAX reference (f32, HIGHEST precision) for correctness check
# ----------------------------------------------------------------------------
def lenet5_reference(x, params):
    (w1, b1, w2, b2, fw1, fb1, fw2, fb2, fw3, fb3) = params
    dn = ("NCHW", "OIHW", "NCHW")
    hp = jax.lax.Precision.HIGHEST

    y = jax.lax.conv_general_dilated(x, w1, (1, 1), ((2, 2), (2, 2)),
                                     dimension_numbers=dn, precision=hp)
    y = jax.nn.relu(y + b1[None, :, None, None])
    y = jax.lax.reduce_window(y, -jnp.inf, jax.lax.max,
                              (1, 1, 2, 2), (1, 1, 2, 2), "VALID")
    y = jax.lax.conv_general_dilated(y, w2, (1, 1), "VALID",
                                     dimension_numbers=dn, precision=hp)
    y = jax.nn.relu(y + b2[None, :, None, None])
    y = jax.lax.reduce_window(y, -jnp.inf, jax.lax.max,
                              (1, 1, 2, 2), (1, 1, 2, 2), "VALID")
    y = y.reshape(y.shape[0], -1)
    y = jax.nn.relu(jnp.dot(y, fw1.T, precision=hp) + fb1)
    y = jax.nn.relu(jnp.dot(y, fw2.T, precision=hp) + fb2)
    y = jnp.dot(y, fw3.T, precision=hp) + fb3
    return y


# ----------------------------------------------------------------------------
# Deterministic parameter init (PyTorch-default-style uniform)
# ----------------------------------------------------------------------------
def init_params(key):
    def uinit(k, shape, fan_in):
        bound = 1.0 / np.sqrt(fan_in)
        return jax.random.uniform(k, shape, jnp.float32, -bound, bound)

    ks = jax.random.split(key, 10)
    w1 = uinit(ks[0], (6, 1, 5, 5), 25);    b1 = uinit(ks[1], (6,), 25)
    w2 = uinit(ks[2], (16, 6, 5, 5), 150);  b2 = uinit(ks[3], (16,), 150)
    fw1 = uinit(ks[4], (120, 400), 400);    fb1 = uinit(ks[5], (120,), 400)
    fw2 = uinit(ks[6], (84, 120), 120);     fb2 = uinit(ks[7], (84,), 120)
    fw3 = uinit(ks[8], (10, 84), 84);       fb3 = uinit(ks[9], (10,), 84)
    return (w1, b1, w2, b2, fw1, fb1, fw2, fb2, fw3, fb3)


if __name__ == "__main__":
    root = jax.random.PRNGKey(0)
    pkey, xkey = jax.random.split(root)
    params = init_params(pkey)

    # Input spatial size 28x28 is dictated by fc1's 16*5*5 = 400 fan-in.
    x = jax.random.normal(xkey, (2, 1, 28, 28), dtype=jnp.float32)

    out = jax.block_until_ready(jax.jit(lenet5_forward)(x, params))
    ref = jax.block_until_ready(jax.jit(lenet5_reference)(x, params))

    assert out.shape == (2, 10), out.shape
    # Kernel feeds the MXU bf16 (f32 accumulation); compare at bf16-appropriate tol.
    np.testing.assert_allclose(np.asarray(out), np.asarray(ref),
                               rtol=2e-2, atol=2e-2)
    print("KERNEL_OK")
</pallas_src>

<mosaic_0001>
module attributes {stable_mosaic.version = 11 : i64} {
  func.func @_conv_relu_pool_kernel(%arg0: i32, %arg1: memref<1600x25xbf16, #tpu.memory_space<vmem>>, %arg2: memref<25x128xbf16, #tpu.memory_space<vmem>>, %arg3: memref<1x128xf32, #tpu.memory_space<vmem>>, %arg4: memref<400x128xbf16, #tpu.memory_space<vmem>>) attributes {dimension_semantics = [#tpu.dimension_semantics<parallel>], iteration_bounds = array<i64: 1>, scalar_prefetch = 0 : i64, scratch_operands = 0 : i64, tpu.core_type = #tpu.core_type<tc>, window_params = [{transform_indices = @transform_0, window_bounds = array<i64: 1600, 25>}, {pipeline_mode = #tpu.pipeline_mode<synchronous>, transform_indices = @transform_1, window_bounds = array<i64: 25, 128>}, {pipeline_mode = #tpu.pipeline_mode<synchronous>, transform_indices = @transform_2, window_bounds = array<i64: 1, 128>}, {transform_indices = @transform_3, window_bounds = array<i64: 400, 128>}]} {
    %c0 = arith.constant 0 : index
    %c0_0 = arith.constant 0 : index
    %0 = vector.load %arg1[%c0, %c0_0] : memref<1600x25xbf16, #tpu.memory_space<vmem>>, vector<1600x25xbf16>
    %c0_1 = arith.constant 0 : index
    %c0_2 = arith.constant 0 : index
    %1 = vector.load %arg2[%c0_1, %c0_2] : memref<25x128xbf16, #tpu.memory_space<vmem>>, vector<25x128xbf16>
    %cst = arith.constant dense<0.000000e+00> : vector<1600x128xf32>
    %2 = tpu.matmul %0, %1, %cst {dimension_numbers = #tpu.dot_dimension_numbers<[1], [0], [0], [1], [0, 0, 1, 1], [], []>} : vector<1600x25xbf16>, vector<25x128xbf16>, vector<1600x128xf32> -> vector<1600x128xf32>
    %3 = vector.extract_strided_slice %2 {offsets = [0, 0], sizes = [400, 128], strides = [1, 1]} : vector<1600x128xf32> to vector<400x128xf32>
    %4 = vector.extract_strided_slice %2 {offsets = [400, 0], sizes = [400, 128], strides = [1, 1]} : vector<1600x128xf32> to vector<400x128xf32>
    %5 = arith.maximumf %3, %4 : vector<400x128xf32>
    %6 = vector.extract_strided_slice %2 {offsets = [800, 0], sizes = [400, 128], strides = [1, 1]} : vector<1600x128xf32> to vector<400x128xf32>
    %7 = vector.extract_strided_slice %2 {offsets = [1200, 0], sizes = [400, 128], strides = [1, 1]} : vector<1600x128xf32> to vector<400x128xf32>
    %8 = arith.maximumf %6, %7 : vector<400x128xf32>
    %9 = arith.maximumf %5, %8 : vector<400x128xf32>
    %c0_3 = arith.constant 0 : index
    %c0_4 = arith.constant 0 : index
    %10 = vector.load %arg3[%c0_3, %c0_4] : memref<1x128xf32, #tpu.memory_space<vmem>>, vector<1x128xf32>
    %11 = vector.broadcast %10 : vector<1x128xf32> to vector<400x128xf32>
    %12 = arith.addf %9, %11 : vector<400x128xf32>
    %cst_5 = arith.constant 0.000000e+00 : f32
    %13 = vector.broadcast %cst_5 : f32 to vector<400x128xf32>
    %14 = arith.maximumf %12, %13 : vector<400x128xf32>
    %15 = arith.truncf %14 : vector<400x128xf32> to vector<400x128xbf16>
    %c0_6 = arith.constant 0 : index
    %c0_7 = arith.constant 0 : index
    %16 = vector.load %arg4[%c0_6, %c0_7] : memref<400x128xbf16, #tpu.memory_space<vmem>>, vector<400x128xbf16>
    tpu.vector_store %arg4[%c0_6, %c0_7], %15 {strides = array<i32>} : memref<400x128xbf16, #tpu.memory_space<vmem>>, vector<400x128xbf16>,
    return
  }
  func.func @transform_0(%arg0: i32) -> (i32, i32) {
    %c0_i32 = arith.constant 0 : i32
    %c0_i32_0 = arith.constant 0 : i32
    return %arg0, %c0_i32 : i32, i32
  }
  func.func @transform_1(%arg0: i32) -> (i32, i32) {
    %c0_i32 = arith.constant 0 : i32
    %c0_i32_0 = arith.constant 0 : i32
    %c0_i32_1 = arith.constant 0 : i32
    return %c0_i32, %c0_i32_0 : i32, i32
  }
  func.func @transform_2(%arg0: i32) -> (i32, i32) {
    %c0_i32 = arith.constant 0 : i32
    %c0_i32_0 = arith.constant 0 : i32
    %c0_i32_1 = arith.constant 0 : i32
    return %c0_i32, %c0_i32_0 : i32, i32
  }
  func.func @transform_3(%arg0: i32) -> (i32, i32) {
    %c0_i32 = arith.constant 0 : i32
    %c0_i32_0 = arith.constant 0 : i32
    return %arg0, %c0_i32 : i32, i32
  }
}

module attributes {stable_mosaic.version = 11 : i64} {
  func.func @_conv_relu_pool_kernel(%arg0: i32, %arg1: memref<256x150xbf16, #tpu.memory_space<vmem>>, %arg2: memref<150x128xbf16, #tpu.memory_space<vmem>>, %arg3: memref<1x128xf32, #tpu.memory_space<vmem>>, %arg4: memref<64x128xbf16, #tpu.memory_space<vmem>>) attributes {dimension_semantics = [#tpu.dimension_semantics<parallel>], iteration_bounds = array<i64: 1>, scalar_prefetch = 0 : i64, scratch_operands = 0 : i64, tpu.core_type = #tpu.core_type<tc>, window_params = [{transform_indices = @transform_0, window_bounds = array<i64: 256, 150>}, {pipeline_mode = #tpu.pipeline_mode<synchronous>, transform_indices = @transform_1, window_bounds = array<i64: 150, 128>}, {pipeline_mode = #tpu.pipeline_mode<synchronous>, transform_indices = @transform_2, window_bounds = array<i64: 1, 128>}, {transform_indices = @transform_3, window_bounds = array<i64: 64, 128>}]} {
    %c0 = arith.constant 0 : index
    %c0_0 = arith.constant 0 : index
    %0 = vector.load %arg1[%c0, %c0_0] : memref<256x150xbf16, #tpu.memory_space<vmem>>, vector<256x150xbf16>
    %c0_1 = arith.constant 0 : index
    %c0_2 = arith.constant 0 : index
    %1 = vector.load %arg2[%c0_1, %c0_2] : memref<150x128xbf16, #tpu.memory_space<vmem>>, vector<150x128xbf16>
    %cst = arith.constant dense<0.000000e+00> : vector<256x128xf32>
    %2 = tpu.matmul %0, %1, %cst {dimension_numbers = #tpu.dot_dimension_numbers<[1], [0], [0], [1], [0, 0, 1, 1], [], []>} : vector<256x150xbf16>, vector<150x128xbf16>, vector<256x128xf32> -> vector<256x128xf32>
    %3 = vector.extract_strided_slice %2 {offsets = [0, 0], sizes = [64, 128], strides = [1, 1]} : vector<256x128xf32> to vector<64x128xf32>
    %4 = vector.extract_strided_slice %2 {offsets = [64, 0], sizes = [64, 128], strides = [1, 1]} : vector<256x128xf32> to vector<64x128xf32>
    %5 = arith.maximumf %3, %4 : vector<64x128xf32>
    %6 = vector.extract_strided_slice %2 {offsets = [128, 0], sizes = [64, 128], strides = [1, 1]} : vector<256x128xf32> to vector<64x128xf32>
    %7 = vector.extract_strided_slice %2 {offsets = [192, 0], sizes = [64, 128], strides = [1, 1]} : vector<256x128xf32> to vector<64x128xf32>
    %8 = arith.maximumf %6, %7 : vector<64x128xf32>
    %9 = arith.maximumf %5, %8 : vector<64x128xf32>
    %c0_3 = arith.constant 0 : index
    %c0_4 = arith.constant 0 : index
    %10 = vector.load %arg3[%c0_3, %c0_4] : memref<1x128xf32, #tpu.memory_space<vmem>>, vector<1x128xf32>
    %11 = vector.broadcast %10 : vector<1x128xf32> to vector<64x128xf32>
    %12 = arith.addf %9, %11 : vector<64x128xf32>
    %cst_5 = arith.constant 0.000000e+00 : f32
    %13 = vector.broadcast %cst_5 : f32 to vector<64x128xf32>
    %14 = arith.maximumf %12, %13 : vector<64x128xf32>
    %15 = arith.truncf %14 : vector<64x128xf32> to vector<64x128xbf16>
    %c0_6 = arith.constant 0 : index
    %c0_7 = arith.constant 0 : index
    %16 = vector.load %arg4[%c0_6, %c0_7] : memref<64x128xbf16, #tpu.memory_space<vmem>>, vector<64x128xbf16>
    tpu.vector_store %arg4[%c0_6, %c0_7], %15 {strides = array<i32>} : memref<64x128xbf16, #tpu.memory_space<vmem>>, vector<64x128xbf16>,
    return
  }
  func.func @transform_0(%arg0: i32) -> (i32, i32) {
    %c0_i32 = arith.constant 0 : i32
    %c0_i32_0 = arith.constant 0 : i32
    return %arg0, %c0_i32 : i32, i32
  }
  func.func @transform_1(%arg0: i32) -> (i32, i32) {
    %c0_i32 = arith.constant 0 : i32
    %c0_i32_0 = arith.constant 0 : i32
    %c0_i32_1 = arith.constant 0 : i32
    return %c0_i32, %c0_i32_0 : i32, i32
  }
  func.func @transform_2(%arg0: i32) -> (i32, i32) {
    %c0_i32 = arith.constant 0 : i32
    %c0_i32_0 = arith.constant 0 : i32
    %c0_i32_1 = arith.constant 0 : i32
    return %c0_i32, %c0_i32_0 : i32, i32
  }
  func.func @transform_3(%arg0: i32) -> (i32, i32) {
    %c0_i32 = arith.constant 0 : i32
    %c0_i32_0 = arith.constant 0 : i32
    return %arg0, %c0_i32 : i32, i32
  }
}

module attributes {stable_mosaic.version = 11 : i64} {
  func.func @_mlp_kernel(%arg0: i32, %arg1: memref<8x400xbf16, #tpu.memory_space<vmem>>, %arg2: memref<400x120xbf16, #tpu.memory_space<vmem>>, %arg3: memref<1x120xf32, #tpu.memory_space<vmem>>, %arg4: memref<120x84xbf16, #tpu.memory_space<vmem>>, %arg5: memref<1x84xf32, #tpu.memory_space<vmem>>, %arg6: memref<84x10xbf16, #tpu.memory_space<vmem>>, %arg7: memref<1x10xf32, #tpu.memory_space<vmem>>, %arg8: memref<8x10xf32, #tpu.memory_space<vmem>>) attributes {dimension_semantics = [#tpu.dimension_semantics<parallel>], iteration_bounds = array<i64: 1>, scalar_prefetch = 0 : i64, scratch_operands = 0 : i64, tpu.core_type = #tpu.core_type<tc>, window_params = [{transform_indices = @transform_0, window_bounds = array<i64: 8, 400>}, {pipeline_mode = #tpu.pipeline_mode<synchronous>, transform_indices = @transform_1, window_bounds = array<i64: 400, 120>}, {pipeline_mode = #tpu.pipeline_mode<synchronous>, transform_indices = @transform_2, window_bounds = array<i64: 1, 120>}, {pipeline_mode = #tpu.pipeline_mode<synchronous>, transform_indices = @transform_3, window_bounds = array<i64: 120, 84>}, {pipeline_mode = #tpu.pipeline_mode<synchronous>, transform_indices = @transform_4, window_bounds = array<i64: 1, 84>}, {pipeline_mode = #tpu.pipeline_mode<synchronous>, transform_indices = @transform_5, window_bounds = array<i64: 84, 10>}, {pipeline_mode = #tpu.pipeline_mode<synchronous>, transform_indices = @transform_6, window_bounds = array<i64: 1, 10>}, {transform_indices = @transform_7, window_bounds = array<i64: 8, 10>}]} {
    %c0 = arith.constant 0 : index
    %c0_0 = arith.constant 0 : index
    %0 = vector.load %arg1[%c0, %c0_0] : memref<8x400xbf16, #tpu.memory_space<vmem>>, vector<8x400xbf16>
    %c0_1 = arith.constant 0 : index
    %c0_2 = arith.constant 0 : index
    %1 = vector.load %arg2[%c0_1, %c0_2] : memref<400x120xbf16, #tpu.memory_space<vmem>>, vector<400x120xbf16>
    %cst = arith.constant dense<0.000000e+00> : vector<8x120xf32>
    %2 = tpu.matmul %0, %1, %cst {dimension_numbers = #tpu.dot_dimension_numbers<[1], [0], [0], [1], [0, 0, 1, 1], [], []>} : vector<8x400xbf16>, vector<400x120xbf16>, vector<8x120xf32> -> vector<8x120xf32>
    %c0_3 = arith.constant 0 : index
    %c0_4 = arith.constant 0 : index
    %3 = vector.load %arg3[%c0_3, %c0_4] : memref<1x120xf32, #tpu.memory_space<vmem>>, vector<1x120xf32>
    %4 = vector.broadcast %3 : vector<1x120xf32> to vector<8x120xf32>
    %5 = arith.addf %2, %4 : vector<8x120xf32>
    %cst_5 = arith.constant 0.000000e+00 : f32
    %6 = vector.broadcast %cst_5 : f32 to vector<8x120xf32>
    %7 = arith.maximumf %5, %6 : vector<8x120xf32>
    %8 = arith.truncf %7 : vector<8x120xf32> to vector<8x120xbf16>
    %c0_6 = arith.constant 0 : index
    %c0_7 = arith.constant 0 : index
    %9 = vector.load %arg4[%c0_6, %c0_7] : memref<120x84xbf16, #tpu.memory_space<vmem>>, vector<120x84xbf16>
    %cst_8 = arith.constant dense<0.000000e+00> : vector<8x84xf32>
    %10 = tpu.matmul %8, %9, %cst_8 {dimension_numbers = #tpu.dot_dimension_numbers<[1], [0], [0], [1], [0, 0, 1, 1], [], []>} : vector<8x120xbf16>, vector<120x84xbf16>, vector<8x84xf32> -> vector<8x84xf32>
    %c0_9 = arith.constant 0 : index
    %c0_10 = arith.constant 0 : index
    %11 = vector.load %arg5[%c0_9, %c0_10] : memref<1x84xf32, #tpu.memory_space<vmem>>, vector<1x84xf32>
    %12 = vector.broadcast %11 : vector<1x84xf32> to vector<8x84xf32>
    %13 = arith.addf %10, %12 : vector<8x84xf32>
    %cst_11 = arith.constant 0.000000e+00 : f32
    %14 = vector.broadcast %cst_11 : f32 to vector<8x84xf32>
    %15 = arith.maximumf %13, %14 : vector<8x84xf32>
    %16 = arith.truncf %15 : vector<8x84xf32> to vector<8x84xbf16>
    %c0_12 = arith.constant 0 : index
    %c0_13 = arith.constant 0 : index
    %17 = vector.load %arg6[%c0_12, %c0_13] : memref<84x10xbf16, #tpu.memory_space<vmem>>, vector<84x10xbf16>
    %cst_14 = arith.constant dense<0.000000e+00> : vector<8x10xf32>
    %18 = tpu.matmul %16, %17, %cst_14 {dimension_numbers = #tpu.dot_dimension_numbers<[1], [0], [0], [1], [0, 0, 1, 1], [], []>} : vector<8x84xbf16>, vector<84x10xbf16>, vector<8x10xf32> -> vector<8x10xf32>
    %c0_15 = arith.constant 0 : index
    %c0_16 = arith.constant 0 : index
    %19 = vector.load %arg7[%c0_15, %c0_16] : memref<1x10xf32, #tpu.memory_space<vmem>>, vector<1x10xf32>
    %20 = vector.broadcast %19 : vector<1x10xf32> to vector<8x10xf32>
    %21 = arith.addf %18, %20 : vector<8x10xf32>
    %c0_17 = arith.constant 0 : index
    %c0_18 = arith.constant 0 : index
    %22 = vector.load %arg8[%c0_17, %c0_18] : memref<8x10xf32, #tpu.memory_space<vmem>>, vector<8x10xf32>
    tpu.vector_store %arg8[%c0_17, %c0_18], %21 {strides = array<i32>} : memref<8x10xf32, #tpu.memory_space<vmem>>, vector<8x10xf32>,
    return
  }
  func.func @transform_0(%arg0: i32) -> (i32, i32) {
    %c0_i32 = arith.constant 0 : i32
    %c0_i32_0 = arith.constant 0 : i32
    return %arg0, %c0_i32 : i32, i32
  }
  func.func @transform_1(%arg0: i32) -> (i32, i32) {
    %c0_i32 = arith.constant 0 : i32
    %c0_i32_0 = arith.constant 0 : i32
    %c0_i32_1 = arith.constant 0 : i32
    return %c0_i32, %c0_i32_0 : i32, i32
  }
  func.func @transform_2(%arg0: i32) -> (i32, i32) {
    %c0_i32 = arith.constant 0 : i32
    %c0_i32_0 = arith.constant 0 : i32
    %c0_i32_1 = arith.constant 0 : i32
    return %c0_i32, %c0_i32_0 : i32, i32
  }
  func.func @transform_3(%arg0: i32) -> (i32, i32) {
    %c0_i32 = arith.constant 0 : i32
    %c0_i32_0 = arith.constant 0 : i32
    %c0_i32_1 = arith.constant 0 : i32
    return %c0_i32, %c0_i32_0 : i32, i32
  }
  func.func @transform_4(%arg0: i32) -> (i32, i32) {
    %c0_i32 = arith.constant 0 : i32
    %c0_i32_0 = arith.constant 0 : i32
    %c0_i32_1 = arith.constant 0 : i32
    return %c0_i32, %c0_i32_0 : i32, i32
  }
  func.func @transform_5(%arg0: i32) -> (i32, i32) {
    %c0_i32 = arith.constant 0 : i32
    %c0_i32_0 = arith.constant 0 : i32
    %c0_i32_1 = arith.constant 0 : i32
    return %c0_i32, %c0_i32_0 : i32, i32
  }
  func.func @transform_6(%arg0: i32) -> (i32, i32) {
    %c0_i32 = arith.constant 0 : i32
    %c0_i32_0 = arith.constant 0 : i32
    %c0_i32_1 = arith.constant 0 : i32
    return %c0_i32, %c0_i32_0 : i32, i32
  }
  func.func @transform_7(%arg0: i32) -> (i32, i32) {
    %c0_i32 = arith.constant 0 : i32
    %c0_i32_0 = arith.constant 0 : i32
    return %arg0, %c0_i32 : i32, i32
  }
}

</mosaic_0001>

<llo_original>
// kernel: lenet5_forward.3
$region0: #{lenet5_forward.3}
  #allocation0 [shape = 'u32[]', space=smem, size = 0x4, offset = 0x4, fixed_abs, tag = 'smem constant byte address 0x4 - core index']
  #allocation1 [shape = 'u32[72,128]{1,0:T(1,128)}', space=vmem, size = 0x9000, scoped, tag = 'internal scratch']
  %s0 = inlined_call_operand.vmem [shape: bf16[1600,25], index: 0, kind: input, shape index: {}]
  %s1 = inlined_call_operand.vmem [shape: bf16[25,128], index: 1, kind: input, shape index: {}]
  %s2 = inlined_call_operand.vmem [shape: f32[1,128], index: 2, kind: input, shape index: {}]
  %s3 = inlined_call_operand.vmem [shape: bf16[400,128], index: 3, kind: output, shape index: {}]
  %s4 = sld [smem:[#allocation0]]
  $region22: #{lenet5_forward.3} parent=0
    _
  %s6 = ssub.s32 1, %s4
  %s7 = scalar_select 0, %s6, %s4
  // Predicated region
  $region2: #{lenet5_forward.3} parent=0 // pred_check
    _
  $region3: #{lenet5_forward.3} parent=0 // pred_check_branch
    %9 = sbr.rel (0) target = $region5
  $region4: #{lenet5_forward.3} parent=0 // pred_region
    _
  $region5: #{lenet5_forward.3} parent=0 // pred_fallthru
    _
  // Predicated region
  $region6: #{lenet5_forward.3} parent=0 // pred_check
    _
  $region7: #{lenet5_forward.3} parent=0 // pred_check_branch
    %11 = sbr.rel (0) target = $region9
  $region8: #{lenet5_forward.3} parent=0 // pred_region
    _
  $region9: #{lenet5_forward.3} parent=0 // pred_fallthru
    _
  // Predicated region
  $region10: #{lenet5_forward.3} parent=0 // pred_check
    _
  $region11: #{lenet5_forward.3} parent=0 // pred_check_branch
    %13 = sbr.rel (0) target = $region13
  $region12: #{lenet5_forward.3} parent=0 // pred_region
    _
  $region13: #{lenet5_forward.3} parent=0 // pred_fallthru
    _
  %v15 = vld [vmem:[%s0] sm:$0xf]
  %v16 = vld [vmem:[%s0 + $0x4] sm:$0xf]
  %v17 = vld [vmem:[%s0 + $0x8] sm:$0xf]
  %v18 = vld [vmem:[%s0 + $0xc] sm:$0xf]
  %v19 = vld [vmem:[%s0 + $0x10] sm:$0xf]
  %v20 = vld [vmem:[%s0 + $0x14] sm:$0xf]
  %v21 = vld [vmem:[%s0 + $0x18] sm:$0xf]
  %v22 = vld [vmem:[%s0 + $0x1c] sm:$0xf]
  %v23 = vld [vmem:[%s0 + $0x20] sm:$0xf]
  %v24 = vld [vmem:[%s0 + $0x24] sm:$0xf]
  %v25 = vld [vmem:[%s0 + $0x28] sm:$0xf]
  %v26 = vld [vmem:[%s0 + $0x2c] sm:$0xf]
  %v27 = vld [vmem:[%s0 + $0x30] sm:$0xf]
  %v28 = vld [vmem:[%s0 + $0x34] sm:$0xf]
  %v29 = vld [vmem:[%s0 + $0x38] sm:$0xf]
  %v30 = vld [vmem:[%s0 + $0x3c] sm:$0xf]
  %v31 = vld [vmem:[%s0 + $0x40] sm:$0xf]
  %v32 = vld [vmem:[%s0 + $0x44] sm:$0xf]
  %v33 = vld [vmem:[%s0 + $0x48] sm:$0xf]
  %v34 = vld [vmem:[%s0 + $0x4c] sm:$0xf]
  %v35 = vld [vmem:[%s0 + $0x50] sm:$0xf]
  %v36 = vld [vmem:[%s0 + $0x54] sm:$0xf]
  %v37 = vld [vmem:[%s0 + $0x58] sm:$0xf]
  %v38 = vld [vmem:[%s0 + $0x5c] sm:$0xf]
  %v39 = vld [vmem:[%s0 + $0x60] sm:$0xf]
  %v40 = vld [vmem:[%s0 + $0x64] sm:$0xf]
  %v41 = vld [vmem:[%s0 + $0x68] sm:$0xf]
  %v42 = vld [vmem:[%s0 + $0x6c] sm:$0xf]
  %v43 = vld [vmem:[%s0 + $0x70] sm:$0xf]
  %v44 = vld [vmem:[%s0 + $0x74] sm:$0xf]
  %v45 = vld [vmem:[%s0 + $0x78] sm:$0xf]
  %v46 = vld [vmem:[%s0 + $0x7c] sm:$0xf]
  %v47 = vld [vmem:[%s0 + $0x80] sm:$0xf]
  %v48 = vld [vmem:[%s0 + $0x84] sm:$0xf]
  %v49 = vld [vmem:[%s0 + $0x88] sm:$0xf]
  %v50 = vld [vmem:[%s0 + $0x8c] sm:$0xf]
  %v51 = vld [vmem:[%s0 + $0x90] sm:$0xf]
  %v52 = vld [vmem:[%s0 + $0x94] sm:$0xf]
  %v53 = vld [vmem:[%s0 + $0x98] sm:$0xf]
  %v54 = vld [vmem:[%s0 + $0x9c] sm:$0xf]
  %v55 = vld [vmem:[%s0 + $0xa0] sm:$0xf]
  %v56 = vld [vmem:[%s0 + $0xa4] sm:$0xf]
  %v57 = vld [vmem:[%s0 + $0xa8] sm:$0xf]
  %v58 = vld [vmem:[%s0 + $0xac] sm:$0xf]
  %v59 = vld [vmem:[%s0 + $0xb0] sm:$0xf]
  %v60 = vld [vmem:[%s0 + $0xb4] sm:$0xf]
  %v61 = vld [vmem:[%s0 + $0xb8] sm:$0xf]
  %v62 = vld [vmem:[%s0 + $0xbc] sm:$0xf]
  %v63 = vld [vmem:[%s0 + $0xc0] sm:$0xf]
  %v64 = vld [vmem:[%s0 + $0xc4] sm:$0xf]
  %v65 = vld [vmem:[%s0 + $0xc8] sm:$0xf]
  %v66 = vld [vmem:[%s0 + $0xcc] sm:$0xf]
  %v67 = vld [vmem:[%s0 + $0xd0] sm:$0xf]
  %v68 = vld [vmem:[%s0 + $0xd4] sm:$0xf]
  %v69 = vld [vmem:[%s0 + $0xd8] sm:$0xf]
  %v70 = vld [vmem:[%s0 + $0xdc] sm:$0xf]
  %v71 = vld [vmem:[%s0 + $0xe0] sm:$0xf]
  %v72 = vld [vmem:[%s0 + $0xe4] sm:$0xf]
  %v73 = vld [vmem:[%s0 + $0xe8] sm:$0xf]
  %v74 = vld [vmem:[%s0 + $0xec] sm:$0xf]
  %v75 = vld [vmem:[%s0 + $0xf0] sm:$0xf]
  %v76 = vld [vmem:[%s0 + $0xf4] sm:$0xf]
  %v77 = vld [vmem:[%s0 + $0xf8] sm:$0xf]
  %v78 = vld [vmem:[%s0 + $0xfc] sm:$0xf]
  %v79 = vld [vmem:[%s0 + $0x100] sm:$0xf]
  %v80 = vld [vmem:[%s0 + $0x104] sm:$0xf]
  %v81 = vld [vmem:[%s0 + $0x108] sm:$0xf]
  %v82 = vld [vmem:[%s0 + $0x10c] sm:$0xf]
  %v83 = vld [vmem:[%s0 + $0x110] sm:$0xf]
  %v84 = vld [vmem:[%s0 + $0x114] sm:$0xf]
  %v85 = vld [vmem:[%s0 + $0x118] sm:$0xf]
  %v86 = vld [vmem:[%s0 + $0x11c] sm:$0xf]
  %v87 = vld [vmem:[%s0 + $0x120] sm:$0xf]
  %v88 = vld [vmem:[%s0 + $0x124] sm:$0xf]
  %v89 = vld [vmem:[%s0 + $0x128] sm:$0xf]
  %v90 = vld [vmem:[%s0 + $0x12c] sm:$0xf]
  %v91 = vld [vmem:[%s0 + $0x130] sm:$0xf]
  %v92 = vld [vmem:[%s0 + $0x134] sm:$0xf]
  %v93 = vld [vmem:[%s0 + $0x138] sm:$0xf]
  %v94 = vld [vmem:[%s0 + $0x13c] sm:$0xf]
  %v95 = vld [vmem:[%s0 + $0x140] sm:$0xf]
  %v96 = vld [vmem:[%s0 + $0x144] sm:$0xf]
  %v97 = vld [vmem:[%s0 + $0x148] sm:$0xf]
  %v98 = vld [vmem:[%s0 + $0x14c] sm:$0xf]
  %v99 = vld [vmem:[%s0 + $0x150] sm:$0xf]
  %v100 = vld [vmem:[%s0 + $0x154] sm:$0xf]
  %v101 = vld [vmem:[%s0 + $0x158] sm:$0xf]
  %v102 = vld [vmem:[%s0 + $0x15c] sm:$0xf]
  %v103 = vld [vmem:[%s0 + $0x160] sm:$0xf]
  %v104 = vld [vmem:[%s0 + $0x164] sm:$0xf]
  %v105 = vld [vmem:[%s0 + $0x168] sm:$0xf]
  %v106 = vld [vmem:[%s0 + $0x16c] sm:$0xf]
  %v107 = vld [vmem:[%s0 + $0x170] sm:$0xf]
  %v108 = vld [vmem:[%s0 + $0x174] sm:$0xf]
  %v109 = vld [vmem:[%s0 + $0x178] sm:$0xf]
  %v110 = vld [vmem:[%s0 + $0x17c] sm:$0xf]
  %v111 = vld [vmem:[%s0 + $0x180] sm:$0xf]
  %v112 = vld [vmem:[%s0 + $0x184] sm:$0xf]
  %v113 = vld [vmem:[%s0 + $0x188] sm:$0xf]
  %v114 = vld [vmem:[%s0 + $0x18c] sm:$0xf]
  %v115 = vld [vmem:[%s0 + $0x190] sm:$0xf]
  %v116 = vld [vmem:[%s0 + $0x194] sm:$0xf]
  %v117 = vld [vmem:[%s0 + $0x198] sm:$0xf]
  %v118 = vld [vmem:[%s0 + $0x19c] sm:$0xf]
  %v119 = vld [vmem:[%s0 + $0x1a0] sm:$0xf]
  %v120 = vld [vmem:[%s0 + $0x1a4] sm:$0xf]
  %v121 = vld [vmem:[%s0 + $0x1a8] sm:$0xf]
  %v122 = vld [vmem:[%s0 + $0x1ac] sm:$0xf]
  %v123 = vld [vmem:[%s0 + $0x1b0] sm:$0xf]
  %v124 = vld [vmem:[%s0 + $0x1b4] sm:$0xf]
  %v125 = vld [vmem:[%s0 + $0x1b8] sm:$0xf]
  %v126 = vld [vmem:[%s0 + $0x1bc] sm:$0xf]
  %v127 = vld [vmem:[%s0 + $0x1c0] sm:$0xf]
  %v128 = vld [vmem:[%s0 + $0x1c4] sm:$0xf]
  %v129 = vld [vmem:[%s0 + $0x1c8] sm:$0xf]
  %v130 = vld [vmem:[%s0 + $0x1cc] sm:$0xf]
  %v131 = vld [vmem:[%s0 + $0x1d0] sm:$0xf]
  %v132 = vld [vmem:[%s0 + $0x1d4] sm:$0xf]
  %v133 = vld [vmem:[%s0 + $0x1d8] sm:$0xf]
  %v134 = vld [vmem:[%s0 + $0x1dc] sm:$0xf]
  %v135 = vld [vmem:[%s0 + $0x1e0] sm:$0xf]
  %v136 = vld [vmem:[%s0 + $0x1e4] sm:$0xf]
  %v137 = vld [vmem:[%s0 + $0x1e8] sm:$0xf]
  %v138 = vld [vmem:[%s0 + $0x1ec] sm:$0xf]
  %v139 = vld [vmem:[%s0 + $0x1f0] sm:$0xf]
  %v140 = vld [vmem:[%s0 + $0x1f4] sm:$0xf]
  %v141 = vld [vmem:[%s0 + $0x1f8] sm:$0xf]
  %v142 = vld [vmem:[%s0 + $0x1fc] sm:$0xf]
  %v143 = vld [vmem:[%s0 + $0x200] sm:$0xf]
  %v144 = vld [vmem:[%s0 + $0x204] sm:$0xf]
  %v145 = vld [vmem:[%s0 + $0x208] sm:$0xf]
  %v146 = vld [vmem:[%s0 + $0x20c] sm:$0xf]
  %v147 = vld [vmem:[%s0 + $0x210] sm:$0xf]
  %v148 = vld [vmem:[%s0 + $0x214] sm:$0xf]
  %v149 = vld [vmem:[%s0 + $0x218] sm:$0xf]
  %v150 = vld [vmem:[%s0 + $0x21c] sm:$0xf]
  %v151 = vld [vmem:[%s0 + $0x220] sm:$0xf]
  %v152 = vld [vmem:[%s0 + $0x224] sm:$0xf]
  %v153 = vld [vmem:[%s0 + $0x228] sm:$0xf]
  %v154 = vld [vmem:[%s0 + $0x22c] sm:$0xf]
  %v155 = vld [vmem:[%s0 + $0x230] sm:$0xf]
  %v156 = vld [vmem:[%s0 + $0x234] sm:$0xf]
  %v157 = vld [vmem:[%s0 + $0x238] sm:$0xf]
  %v158 = vld [vmem:[%s0 + $0x23c] sm:$0xf]
  %v159 = vld [vmem:[%s0 + $0x240] sm:$0xf]
  %v160 = vld [vmem:[%s0 + $0x244] sm:$0xf]
  %v161 = vld [vmem:[%s0 + $0x248] sm:$0xf]
  %v162 = vld [vmem:[%s0 + $0x24c] sm:$0xf]
  %v163 = vld [vmem:[%s0 + $0x250] sm:$0xf]
  %v164 = vld [vmem:[%s0 + $0x254] sm:$0xf]
  %v165 = vld [vmem:[%s0 + $0x258] sm:$0xf]
  %v166 = vld [vmem:[%s0 + $0x25c] sm:$0xf]
  %v167 = vld [vmem:[%s0 + $0x260] sm:$0xf]
  %v168 = vld [vmem:[%s0 + $0x264] sm:$0xf]
  %v169 = vld [vmem:[%s0 + $0x268] sm:$0xf]
  %v170 = vld [vmem:[%s0 + $0x26c] sm:$0xf]
  %v171 = vld [vmem:[%s0 + $0x270] sm:$0xf]
  %v172 = vld [vmem:[%s0 + $0x274] sm:$0xf]
  %v173 = vld [vmem:[%s0 + $0x278] sm:$0xf]
  %v174 = vld [vmem:[%s0 + $0x27c] sm:$0xf]
  %v175 = vld [vmem:[%s0 + $0x280] sm:$0xf]
  %v176 = vld [vmem:[%s0 + $0x284] sm:$0xf]
  %v177 = vld [vmem:[%s0 + $0x288] sm:$0xf]
  %v178 = vld [vmem:[%s0 + $0x28c] sm:$0xf]
  %v179 = vld [vmem:[%s0 + $0x290] sm:$0xf]
  %v180 = vld [vmem:[%s0 + $0x294] sm:$0xf]
  %v181 = vld [vmem:[%s0 + $0x298] sm:$0xf]
  %v182 = vld [vmem:[%s0 + $0x29c] sm:$0xf]
  %v183 = vld [vmem:[%s0 + $0x2a0] sm:$0xf]
  %v184 = vld [vmem:[%s0 + $0x2a4] sm:$0xf]
  %v185 = vld [vmem:[%s0 + $0x2a8] sm:$0xf]
  %v186 = vld [vmem:[%s0 + $0x2ac] sm:$0xf]
  %v187 = vld [vmem:[%s0 + $0x2b0] sm:$0xf]
  %v188 = vld [vmem:[%s0 + $0x2b4] sm:$0xf]
  %v189 = vld [vmem:[%s0 + $0x2b8] sm:$0xf]
  %v190 = vld [vmem:[%s0 + $0x2bc] sm:$0xf]
  %v191 = vld [vmem:[%s0 + $0x2c0] sm:$0xf]
  %v192 = vld [vmem:[%s0 + $0x2c4] sm:$0xf]
  %v193 = vld [vmem:[%s0 + $0x2c8] sm:$0xf]
  %v194 = vld [vmem:[%s0 + $0x2cc] sm:$0xf]
  %v195 = vld [vmem:[%s0 + $0x2d0] sm:$0xf]
  %v196 = vld [vmem:[%s0 + $0x2d4] sm:$0xf]
  %v197 = vld [vmem:[%s0 + $0x2d8] sm:$0xf]
  %v198 = vld [vmem:[%s0 + $0x2dc] sm:$0xf]
  %v199 = vld [vmem:[%s0 + $0x2e0] sm:$0xf]
  %v200 = vld [vmem:[%s0 + $0x2e4] sm:$0xf]
  %v201 = vld [vmem:[%s0 + $0x2e8] sm:$0xf]
  %v202 = vld [vmem:[%s0 + $0x2ec] sm:$0xf]
  %v203 = vld [vmem:[%s0 + $0x2f0] sm:$0xf]
  %v204 = vld [vmem:[%s0 + $0x2f4] sm:$0xf]
  %v205 = vld [vmem:[%s0 + $0x2f8] sm:$0xf]
  %v206 = vld [vmem:[%s0 + $0x2fc] sm:$0xf]
  %v207 = vld [vmem:[%s0 + $0x300] sm:$0xf]
  %v208 = vld [vmem:[%s0 + $0x304] sm:$0xf]
  %v209 = vld [vmem:[%s0 + $0x308] sm:$0xf]
  %v210 = vld [vmem:[%s0 + $0x30c] sm:$0xf]
  %v211 = vld [vmem:[%s0 + $0x310] sm:$0xf]
  %v212 = vld [vmem:[%s0 + $0x314] sm:$0xf]
  %v213 = vld [vmem:[%s0 + $0x318] sm:$0xf]
  %v214 = vld [vmem:[%s0 + $0x31c] sm:$0xf]
  %v215 = vld [vmem:[%s1] sm:$0xf]
  %v216 = vld [vmem:[%s1 + $0x4] sm:$0xf]
  %v217 = vld [vmem:[%s1 + $0x8] sm:$0xf]
  %v218 = vld [vmem:[%s1 + $0xc] sm:$0x1]
  %v419 = vunpack.c.l.b16 %v15
  %v420 = vunpack.c.l.b16 %v16
  %v421 = vunpack.c.l.b16 %v17
  %v422 = vunpack.c.l.b16 %v18
  %v423 = vunpack.c.l.b16 %v19
  %v424 = vunpack.c.l.b16 %v20
  %v425 = vunpack.c.l.b16 %v21
  %v426 = vunpack.c.l.b16 %v22
  %v427 = vunpack.c.l.b16 %v23
  %v428 = vunpack.c.l.b16 %v24
  %v429 = vunpack.c.l.b16 %v25
  %v430 = vunpack.c.l.b16 %v26
  %v431 = vunpack.c.l.b16 %v27
  %v432 = vunpack.c.l.b16 %v28
  %v433 = vunpack.c.l.b16 %v29
  %v434 = vunpack.c.l.b16 %v30
  %v435 = vunpack.c.l.b16 %v31
  %v436 = vunpack.c.l.b16 %v32
  %v437 = vunpack.c.l.b16 %v33
  %v438 = vunpack.c.l.b16 %v34
  %v439 = vunpack.c.l.b16 %v35
  %v440 = vunpack.c.l.b16 %v36
  %v441 = vunpack.c.l.b16 %v37
  %v442 = vunpack.c.l.b16 %v38
  %v443 = vunpack.c.l.b16 %v39
  %v444 = vunpack.c.l.b16 %v40
  %v445 = vunpack.c.l.b16 %v41
  %v446 = vunpack.c.l.b16 %v42
  %v447 = vunpack.c.l.b16 %v43
  %v448 = vunpack.c.l.b16 %v44
  %v449 = vunpack.c.l.b16 %v45
  %v450 = vunpack.c.l.b16 %v46
  %v451 = vunpack.c.l.b16 %v47
  %v452 = vunpack.c.l.b16 %v48
  %v453 = vunpack.c.l.b16 %v49
  %v454 = vunpack.c.l.b16 %v50
  %v455 = vunpack.c.l.b16 %v51
  %v456 = vunpack.c.l.b16 %v52
  %v457 = vunpack.c.l.b16 %v53
  %v458 = vunpack.c.l.b16 %v54
  %v459 = vunpack.c.l.b16 %v55
  %v460 = vunpack.c.l.b16 %v56
  %v461 = vunpack.c.l.b16 %v57
  %v462 = vunpack.c.l.b16 %v58
  %v463 = vunpack.c.l.b16 %v59
  %v464 = vunpack.c.l.b16 %v60
  %v465 = vunpack.c.l.b16 %v61
  %v466 = vunpack.c.l.b16 %v62
  %v467 = vunpack.c.l.b16 %v63
  %v468 = vunpack.c.l.b16 %v64
  %v469 = vunpack.c.l.b16 %v65
  %v470 = vunpack.c.l.b16 %v66
  %v471 = vunpack.c.l.b16 %v67
  %v472 = vunpack.c.l.b16 %v68
  %v473 = vunpack.c.l.b16 %v69
  %v474 = vunpack.c.l.b16 %v70
  %v475 = vunpack.c.l.b16 %v71
  %v476 = vunpack.c.l.b16 %v72
  %v477 = vunpack.c.l.b16 %v73
  %v478 = vunpack.c.l.b16 %v74
  %v479 = vunpack.c.l.b16 %v75
  %v480 = vunpack.c.l.b16 %v76
  %v481 = vunpack.c.l.b16 %v77
  %v482 = vunpack.c.l.b16 %v78
  %v483 = vunpack.c.l.b16 %v79
  %v484 = vunpack.c.l.b16 %v80
  %v485 = vunpack.c.l.b16 %v81
  %v486 = vunpack.c.l.b16 %v82
  %v487 = vunpack.c.l.b16 %v83
  %v488 = vunpack.c.l.b16 %v84
  %v489 = vunpack.c.l.b16 %v85
  %v490 = vunpack.c.l.b16 %v86
  %v491 = vunpack.c.l.b16 %v87
  %v492 = vunpack.c.l.b16 %v88
  %v493 = vunpack.c.l.b16 %v89
  %v494 = vunpack.c.l.b16 %v90
  %v495 = vunpack.c.l.b16 %v91
  %v496 = vunpack.c.l.b16 %v92
  %v497 = vunpack.c.l.b16 %v93
  %v498 = vunpack.c.l.b16 %v94
  %v499 = vunpack.c.l.b16 %v95
  %v500 = vunpack.c.l.b16 %v96
  %v501 = vunpack.c.l.b16 %v97
  %v502 = vunpack.c.l.b16 %v98
  %v503 = vunpack.c.l.b16 %v99
  %v504 = vunpack.c.l.b16 %v100
  %v505 = vunpack.c.l.b16 %v101
  %v506 = vunpack.c.l.b16 %v102
  %v507 = vunpack.c.l.b16 %v103
  %v508 = vunpack.c.l.b16 %v104
  %v509 = vunpack.c.l.b16 %v105
  %v510 = vunpack.c.l.b16 %v106
  %v511 = vunpack.c.l.b16 %v107
  %v512 = vunpack.c.l.b16 %v108
  %v513 = vunpack.c.l.b16 %v109
  %v514 = vunpack.c.l.b16 %v110
  %v515 = vunpack.c.l.b16 %v111
  %v516 = vunpack.c.l.b16 %v112
  %v517 = vunpack.c.l.b16 %v113
  %v518 = vunpack.c.l.b16 %v114
  %v519 = vunpack.c.l.b16 %v115
  %v520 = vunpack.c.l.b16 %v116
  %v521 = vunpack.c.l.b16 %v117
  %v522 = vunpack.c.l.b16 %v118
  %v523 = vunpack.c.l.b16 %v119
  %v524 = vunpack.c.l.b16 %v120
  %v525 = vunpack.c.l.b16 %v121
  %v526 = vunpack.c.l.b16 %v122
  %v527 = vunpack.c.l.b16 %v123
  %v528 = vunpack.c.l.b16 %v124
  %v529 = vunpack.c.l.b16 %v125
  %v530 = vunpack.c.l.b16 %v126
  %v531 = vunpack.c.l.b16 %v127
  %v532 = vunpack.c.l.b16 %v128
  %v533 = vunpack.c.l.b16 %v129
  %v534 = vunpack.c.l.b16 %v130
  %v535 = vunpack.c.l.b16 %v131
  %v536 = vunpack.c.l.b16 %v132
  %v537 = vunpack.c.l.b16 %v133
  %v538 = vunpack.c.l.b16 %v134
  %v539 = vunpack.c.l.b16 %v135
  %v540 = vunpack.c.l.b16 %v136
  %v541 = vunpack.c.l.b16 %v137
  %v542 = vunpack.c.l.b16 %v138
  %v543 = vunpack.c.l.b16 %v139
  %v544 = vunpack.c.l.b16 %v140
  %v545 = vunpack.c.l.b16 %v141
  %v546 = vunpack.c.l.b16 %v142
  %v547 = vunpack.c.l.b16 %v143
  %v548 = vunpack.c.l.b16 %v144
  %v549 = vunpack.c.l.b16 %v145
  %v550 = vunpack.c.l.b16 %v146
  %v551 = vunpack.c.l.b16 %v147
  %v552 = vunpack.c.l.b16 %v148
  %v553 = vunpack.c.l.b16 %v149
  %v554 = vunpack.c.l.b16 %v150
  %v555 = vunpack.c.l.b16 %v151
  %v556 = vunpack.c.l.b16 %v152
  %v557 = vunpack.c.l.b16 %v153
  %v558 = vunpack.c.l.b16 %v154
  %v559 = vunpack.c.l.b16 %v155
  %v560 = vunpack.c.l.b16 %v156
  %v561 = vunpack.c.l.b16 %v157
  %v562 = vunpack.c.l.b16 %v158
  %v563 = vunpack.c.l.b16 %v159
  %v564 = vunpack.c.l.b16 %v160
  %v565 = vunpack.c.l.b16 %v161
  %v566 = vunpack.c.l.b16 %v162
  %v567 = vunpack.c.l.b16 %v163
  %v568 = vunpack.c.l.b16 %v164
  %v569 = vunpack.c.l.b16 %v165
  %v570 = vunpack.c.l.b16 %v166
  %v571 = vunpack.c.l.b16 %v167
  %v572 = vunpack.c.l.b16 %v168
  %v573 = vunpack.c.l.b16 %v169
  %v574 = vunpack.c.l.b16 %v170
  %v575 = vunpack.c.l.b16 %v171
  %v576 = vunpack.c.l.b16 %v172
  %v577 = vunpack.c.l.b16 %v173
  %v578 = vunpack.c.l.b16 %v174
  %v579 = vunpack.c.l.b16 %v175
  %v580 = vunpack.c.l.b16 %v176
  %v581 = vunpack.c.l.b16 %v177
  %v582 = vunpack.c.l.b16 %v178
  %v583 = vunpack.c.l.b16 %v179
  %v584 = vunpack.c.l.b16 %v180
  %v585 = vunpack.c.l.b16 %v181
  %v586 = vunpack.c.l.b16 %v182
  %v587 = vunpack.c.l.b16 %v183
  %v588 = vunpack.c.l.b16 %v184
  %v589 = vunpack.c.l.b16 %v185
  %v590 = vunpack.c.l.b16 %v186
  %v591 = vunpack.c.l.b16 %v187
  %v592 = vunpack.c.l.b16 %v188
  %v593 = vunpack.c.l.b16 %v189
  %v594 = vunpack.c.l.b16 %v190
  %v595 = vunpack.c.l.b16 %v191
  %v596 = vunpack.c.l.b16 %v192
  %v597 = vunpack.c.l.b16 %v193
  %v598 = vunpack.c.l.b16 %v194
  %v599 = vunpack.c.l.b16 %v195
  %v600 = vunpack.c.l.b16 %v196
  %v601 = vunpack.c.l.b16 %v197
  %v602 = vunpack.c.l.b16 %v198
  %v603 = vunpack.c.l.b16 %v199
  %v604 = vunpack.c.l.b16 %v200
  %v605 = vunpack.c.l.b16 %v201
  %v606 = vunpack.c.l.b16 %v202
  %v607 = vunpack.c.l.b16 %v203
  %v608 = vunpack.c.l.b16 %v204
  %v609 = vunpack.c.l.b16 %v205
  %v610 = vunpack.c.l.b16 %v206
  %v611 = vunpack.c.l.b16 %v207
  %v612 = vunpack.c.l.b16 %v208
  %v613 = vunpack.c.l.b16 %v209
  %v614 = vunpack.c.l.b16 %v210
  %v615 = vunpack.c.l.b16 %v211
  %v616 = vunpack.c.l.b16 %v212
  %v617 = vunpack.c.l.b16 %v213
  %v618 = vunpack.c.l.b16 %v214
  %v619 = vpack.c.b16 %v420, %v419
  %v620 = vpack.c.b16 %v422, %v421
  %v621 = vpack.c.b16 %v424, %v423
  %v622 = vpack.c.b16 %v426, %v425
  %v623 = vpack.c.b16 %v428, %v427
  %v624 = vpack.c.b16 %v430, %v429
  %v625 = vpack.c.b16 %v432, %v431
  %v626 = vpack.c.b16 %v434, %v433
  %v627 = vpack.c.b16 %v436, %v435
  %v628 = vpack.c.b16 %v438, %v437
  %v629 = vpack.c.b16 %v440, %v439
  %v630 = vpack.c.b16 %v442, %v441
  %v631 = vpack.c.b16 %v444, %v443
  %v632 = vpack.c.b16 %v446, %v445
  %v633 = vpack.c.b16 %v448, %v447
  %v634 = vpack.c.b16 %v450, %v449
  %v635 = vpack.c.b16 %v452, %v451
  %v636 = vpack.c.b16 %v454, %v453
  %v637 = vpack.c.b16 %v456, %v455
  %v638 = vpack.c.b16 %v458, %v457
  %v639 = vpack.c.b16 %v460, %v459
  %v640 = vpack.c.b16 %v462, %v461
  %v641 = vpack.c.b16 %v464, %v463
  %v642 = vpack.c.b16 %v466, %v465
  %v643 = vpack.c.b16 %v468, %v467
  %v644 = vpack.c.b16 %v470, %v469
  %v645 = vpack.c.b16 %v472, %v471
  %v646 = vpack.c.b16 %v474, %v473
  %v647 = vpack.c.b16 %v476, %v475
  %v648 = vpack.c.b16 %v478, %v477
  %v649 = vpack.c.b16 %v480, %v479
  %v650 = vpack.c.b16 %v482, %v481
  %v651 = vpack.c.b16 %v484, %v483
  %v652 = vpack.c.b16 %v486, %v485
  %v653 = vpack.c.b16 %v488, %v487
  %v654 = vpack.c.b16 %v490, %v489
  %v655 = vpack.c.b16 %v492, %v491
  %v656 = vpack.c.b16 %v494, %v493
  %v657 = vpack.c.b16 %v496, %v495
  %v658 = vpack.c.b16 %v498, %v497
  %v659 = vpack.c.b16 %v500, %v499
  %v660 = vpack.c.b16 %v502, %v501
  %v661 = vpack.c.b16 %v504, %v503
  %v662 = vpack.c.b16 %v506, %v505
  %v663 = vpack.c.b16 %v508, %v507
  %v664 = vpack.c.b16 %v510, %v509
  %v665 = vpack.c.b16 %v512, %v511
  %v666 = vpack.c.b16 %v514, %v513
  %v667 = vpack.c.b16 %v516, %v515
  %v668 = vpack.c.b16 %v518, %v517
  %v669 = vpack.c.b16 %v520, %v519
  %v670 = vpack.c.b16 %v522, %v521
  %v671 = vpack.c.b16 %v524, %v523
  %v672 = vpack.c.b16 %v526, %v525
  %v673 = vpack.c.b16 %v528, %v527
  %v674 = vpack.c.b16 %v530, %v529
  %v675 = vpack.c.b16 %v532, %v531
  %v676 = vpack.c.b16 %v534, %v533
  %v677 = vpack.c.b16 %v536, %v535
  %v678 = vpack.c.b16 %v538, %v537
  %v679 = vpack.c.b16 %v540, %v539
  %v680 = vpack.c.b16 %v542, %v541
  %v681 = vpack.c.b16 %v544, %v543
  %v682 = vpack.c.b16 %v546, %v545
  %v683 = vpack.c.b16 %v548, %v547
  %v684 = vpack.c.b16 %v550, %v549
  %v685 = vpack.c.b16 %v552, %v551
  %v686 = vpack.c.b16 %v554, %v553
  %v687 = vpack.c.b16 %v556, %v555
  %v688 = vpack.c.b16 %v558, %v557
  %v689 = vpack.c.b16 %v560, %v559
  %v690 = vpack.c.b16 %v562, %v561
  %v691 = vpack.c.b16 %v564, %v563
  %v692 = vpack.c.b16 %v566, %v565
  %v693 = vpack.c.b16 %v568, %v567
  %v694 = vpack.c.b16 %v570, %v569
  %v695 = vpack.c.b16 %v572, %v571
  %v696 = vpack.c.b16 %v574, %v573
  %v697 = vpack.c.b16 %v576, %v575
  %v698 = vpack.c.b16 %v578, %v577
  %v699 = vpack.c.b16 %v580, %v579
  %v700 = vpack.c.b16 %v582, %v581
  %v701 = vpack.c.b16 %v584, %v583
  %v702 = vpack.c.b16 %v586, %v585
  %v703 = vpack.c.b16 %v588, %v587
  %v704 = vpack.c.b16 %v590, %v589
  %v705 = vpack.c.b16 %v592, %v591
  %v706 = vpack.c.b16 %v594, %v593
  %v707 = vpack.c.b16 %v596, %v595
  %v708 = vpack.c.b16 %v598, %v597
  %v709 = vpack.c.b16 %v600, %v599
  %v710 = vpack.c.b16 %v602, %v601
  %v711 = vpack.c.b16 %v604, %v603
  %v712 = vpack.c.b16 %v606, %v605
  %v713 = vpack.c.b16 %v608, %v607
  %v714 = vpack.c.b16 %v610, %v609
  %v715 = vpack.c.b16 %v612, %v611
  %v716 = vpack.c.b16 %v614, %v613
  %v717 = vpack.c.b16 %v616, %v615
  %v718 = vpack.c.b16 %v618, %v617
  %v723 = vunpack.c.l.b16 %v215
  %v724 = vunpack.c.l.b16 %v216
  %v725 = vunpack.c.l.b16 %v217
  %v726 = vunpack.c.l.b16 %v218
  %v727 = vpack.c.b16 %v724, %v723
  %v728 = vpack.c.b16 %v726, %v725
  %vm730 = vcmask 203776
  %v732 = vsel %vm730, %v619, 0
  %v735 = vsel %vm730, %v620, 0
  %v738 = vsel %vm730, %v621, 0
  %v741 = vsel %vm730, %v622, 0
  %v744 = vsel %vm730, %v623, 0
  %v747 = vsel %vm730, %v624, 0
  %v750 = vsel %vm730, %v625, 0
  %v753 = vsel %vm730, %v626, 0
  %v756 = vsel %vm730, %v627, 0
  %v759 = vsel %vm730, %v628, 0
  %v762 = vsel %vm730, %v629, 0
  %v765 = vsel %vm730, %v630, 0
  %v768 = vsel %vm730, %v631, 0
  %v771 = vsel %vm730, %v632, 0
  %v774 = vsel %vm730, %v633, 0
  %v777 = vsel %vm730, %v634, 0
  %v780 = vsel %vm730, %v635, 0
  %v783 = vsel %vm730, %v636, 0
  %v786 = vsel %vm730, %v637, 0
  %v789 = vsel %vm730, %v638, 0
  %v792 = vsel %vm730, %v639, 0
  %v795 = vsel %vm730, %v640, 0
  %v798 = vsel %vm730, %v641, 0
  %v801 = vsel %vm730, %v642, 0
  %v804 = vsel %vm730, %v643, 0
  %v807 = vsel %vm730, %v644, 0
  %v810 = vsel %vm730, %v645, 0
  %v813 = vsel %vm730, %v646, 0
  %v816 = vsel %vm730, %v647, 0
  %v819 = vsel %vm730, %v648, 0
  %v822 = vsel %vm730, %v649, 0
  %v825 = vsel %vm730, %v650, 0
  %v828 = vsel %vm730, %v651, 0
  %v831 = vsel %vm730, %v652, 0
  %v834 = vsel %vm730, %v653, 0
  %v837 = vsel %vm730, %v654, 0
  %v840 = vsel %vm730, %v655, 0
  %v843 = vsel %vm730, %v656, 0
  %v846 = vsel %vm730, %v657, 0
  %v849 = vsel %vm730, %v658, 0
  %v852 = vsel %vm730, %v659, 0
  %v855 = vsel %vm730, %v660, 0
  %v858 = vsel %vm730, %v661, 0
  %v861 = vsel %vm730, %v662, 0
  %v864 = vsel %vm730, %v663, 0
  %v867 = vsel %vm730, %v664, 0
  %v870 = vsel %vm730, %v665, 0
  %v873 = vsel %vm730, %v666, 0
  %v876 = vsel %vm730, %v667, 0
  %v879 = vsel %vm730, %v668, 0
  %v882 = vsel %vm730, %v669, 0
  %v885 = vsel %vm730, %v670, 0
  %v888 = vsel %vm730, %v671, 0
  %v891 = vsel %vm730, %v672, 0
  %v894 = vsel %vm730, %v673, 0
  %v897 = vsel %vm730, %v674, 0
  %v900 = vsel %vm730, %v675, 0
  %v903 = vsel %vm730, %v676, 0
  %v906 = vsel %vm730, %v677, 0
  %v909 = vsel %vm730, %v678, 0
  %v912 = vsel %vm730, %v679, 0
  %v915 = vsel %vm730, %v680, 0
  %v918 = vsel %vm730, %v681, 0
  %v921 = vsel %vm730, %v682, 0
  %v924 = vsel %vm730, %v683, 0
  %v927 = vsel %vm730, %v684, 0
  %v930 = vsel %vm730, %v685, 0
  %v933 = vsel %vm730, %v686, 0
  %v936 = vsel %vm730, %v687, 0
  %v939 = vsel %vm730, %v688, 0
  %v942 = vsel %vm730, %v689, 0
  %v945 = vsel %vm730, %v690, 0
  %v948 = vsel %vm730, %v691, 0
  %v951 = vsel %vm730, %v692, 0
  %v954 = vsel %vm730, %v693, 0
  %v957 = vsel %vm730, %v694, 0
  %v960 = vsel %vm730, %v695, 0
  %v963 = vsel %vm730, %v696, 0
  %v966 = vsel %vm730, %v697, 0
  %v969 = vsel %vm730, %v698, 0
  %v972 = vsel %vm730, %v699, 0
  %v975 = vsel %vm730, %v700, 0
  %v978 = vsel %vm730, %v701, 0
  %v981 = vsel %vm730, %v702, 0
  %v984 = vsel %vm730, %v703, 0
  %v987 = vsel %vm730, %v704, 0
  %v990 = vsel %vm730, %v705, 0
  %v993 = vsel %vm730, %v706, 0
  %v996 = vsel %vm730, %v707, 0
  %v999 = vsel %vm730, %v708, 0
  %v1002 = vsel %vm730, %v709, 0
  %v1005 = vsel %vm730, %v710, 0
  %v1008 = vsel %vm730, %v711, 0
  %v1011 = vsel %vm730, %v712, 0
  %v1014 = vsel %vm730, %v713, 0
  %v1017 = vsel %vm730, %v714, 0
  %v1020 = vsel %vm730, %v715, 0
  %v1023 = vsel %vm730, %v716, 0
  %v1026 = vsel %vm730, %v717, 0
  %v1029 = vsel %vm730, %v718, 0
  %vm1031 = vcmask 1043456
  %vm1032 = vcmask 1044480
  %v1033 = vsel %vm1031, 4294967295, 65535
  %v1034 = vsel %vm1032, %v1033, 0
  %v1036 = vand.u32 %v728, %v1034
  %1038 = vmatpush.bf16.msra.mxu0 0
  %1039 = vmatpush.bf16.msra.mxu0 0
  %1040 = vmatpush.bf16.msra.mxu0 0
  %1041 = vmatpush.bf16.msra.mxu0 0
  %1042 = vmatpush.bf16.msra.mxu0 0
  %1043 = vmatpush.bf16.msra.mxu0 0
  %1044 = vmatpush.bf16.msra.mxu0 %v1036
  %1045 = vmatpush.bf16.msra.mxu0 %v727
  %1046 = vmatmul.bf16.gmra.mxu0 %v732
  %v1047 = vpop.f32.mrf.mxu0
  %v1048 = vadd.f32 0.0, %v1047
  %v1049 = vpop.f32.mrf.mxu0
  %v1050 = vadd.f32 0.0, %v1049
  %1051 = vmatmul.bf16.gmra.mxu0 %v735
  %v1052 = vpop.f32.mrf.mxu0
  %v1053 = vadd.f32 0.0, %v1052
  %v1054 = vpop.f32.mrf.mxu0
  %v1055 = vadd.f32 0.0, %v1054
  %1056 = vmatmul.bf16.gmra.mxu0 %v738
  %v1057 = vpop.f32.mrf.mxu0
  %v1058 = vadd.f32 0.0, %v1057
  %v1059 = vpop.f32.mrf.mxu0
  %v1060 = vadd.f32 0.0, %v1059
  %1061 = vmatmul.bf16.gmra.mxu0 %v741
  %v1062 = vpop.f32.mrf.mxu0
  %v1063 = vadd.f32 0.0, %v1062
  %v1064 = vpop.f32.mrf.mxu0
  %v1065 = vadd.f32 0.0, %v1064
  %1066 = vmatmul.bf16.gmra.mxu0 %v744
  %v1067 = vpop.f32.mrf.mxu0
  %v1068 = vadd.f32 0.0, %v1067
  %v1069 = vpop.f32.mrf.mxu0
  %v1070 = vadd.f32 0.0, %v1069
  %1071 = vmatmul.bf16.gmra.mxu0 %v747
  %v1072 = vpop.f32.mrf.mxu0
  %v1073 = vadd.f32 0.0, %v1072
  %v1074 = vpop.f32.mrf.mxu0
  %v1075 = vadd.f32 0.0, %v1074
  %1076 = vmatmul.bf16.gmra.mxu0 %v750
  %v1077 = vpop.f32.mrf.mxu0
  %v1078 = vadd.f32 0.0, %v1077
  %v1079 = vpop.f32.mrf.mxu0
  %v1080 = vadd.f32 0.0, %v1079
  %1081 = vmatmul.bf16.gmra.mxu0 %v753
  %v1082 = vpop.f32.mrf.mxu0
  %v1083 = vadd.f32 0.0, %v1082
  %v1084 = vpop.f32.mrf.mxu0
  %v1085 = vadd.f32 0.0, %v1084
  %1086 = vmatmul.bf16.gmra.mxu0 %v756
  %v1087 = vpop.f32.mrf.mxu0
  %v1088 = vadd.f32 0.0, %v1087
  %v1089 = vpop.f32.mrf.mxu0
  %v1090 = vadd.f32 0.0, %v1089
  %1091 = vmatmul.bf16.gmra.mxu0 %v759
  %v1092 = vpop.f32.mrf.mxu0
  %v1093 = vadd.f32 0.0, %v1092
  %v1094 = vpop.f32.mrf.mxu0
  %v1095 = vadd.f32 0.0, %v1094
  %1096 = vmatmul.bf16.gmra.mxu0 %v762
  %v1097 = vpop.f32.mrf.mxu0
  %v1098 = vadd.f32 0.0, %v1097
  %v1099 = vpop.f32.mrf.mxu0
  %v1100 = vadd.f32 0.0, %v1099
  %1101 = vmatmul.bf16.gmra.mxu0 %v765
  %v1102 = vpop.f32.mrf.mxu0
  %v1103 = vadd.f32 0.0, %v1102
  %v1104 = vpop.f32.mrf.mxu0
  %v1105 = vadd.f32 0.0, %v1104
  %1106 = vmatmul.bf16.gmra.mxu0 %v768
  %v1107 = vpop.f32.mrf.mxu0
  %v1108 = vadd.f32 0.0, %v1107
  %v1109 = vpop.f32.mrf.mxu0
  %v1110 = vadd.f32 0.0, %v1109
  %1111 = vmatmul.bf16.gmra.mxu0 %v771
  %v1112 = vpop.f32.mrf.mxu0
  %v1113 = vadd.f32 0.0, %v1112
  %v1114 = vpop.f32.mrf.mxu0
  %v1115 = vadd.f32 0.0, %v1114
  %1116 = vmatmul.bf16.gmra.mxu0 %v774
  %v1117 = vpop.f32.mrf.mxu0
  %v1118 = vadd.f32 0.0, %v1117
  %v1119 = vpop.f32.mrf.mxu0
  %v1120 = vadd.f32 0.0, %v1119
  %1121 = vmatmul.bf16.gmra.mxu0 %v777
  %v1122 = vpop.f32.mrf.mxu0
  %v1123 = vadd.f32 0.0, %v1122
  %v1124 = vpop.f32.mrf.mxu0
  %v1125 = vadd.f32 0.0, %v1124
  %1126 = vmatmul.bf16.gmra.mxu0 %v780
  %v1127 = vpop.f32.mrf.mxu0
  %v1128 = vadd.f32 0.0, %v1127
  %v1129 = vpop.f32.mrf.mxu0
  %v1130 = vadd.f32 0.0, %v1129
  %1131 = vmatmul.bf16.gmra.mxu0 %v783
  %v1132 = vpop.f32.mrf.mxu0
  %v1133 = vadd.f32 0.0, %v1132
  %v1134 = vpop.f32.mrf.mxu0
  %v1135 = vadd.f32 0.0, %v1134
  %1136 = vmatmul.bf16.gmra.mxu0 %v786
  %v1137 = vpop.f32.mrf.mxu0
  %v1138 = vadd.f32 0.0, %v1137
  %v1139 = vpop.f32.mrf.mxu0
  %v1140 = vadd.f32 0.0, %v1139
  %1141 = vmatmul.bf16.gmra.mxu0 %v789
  %v1142 = vpop.f32.mrf.mxu0
  %v1143 = vadd.f32 0.0, %v1142
  %v1144 = vpop.f32.mrf.mxu0
  %v1145 = vadd.f32 0.0, %v1144
  %1146 = vmatmul.bf16.gmra.mxu0 %v792
  %v1147 = vpop.f32.mrf.mxu0
  %v1148 = vadd.f32 0.0, %v1147
  %v1149 = vpop.f32.mrf.mxu0
  %v1150 = vadd.f32 0.0, %v1149
  %1151 = vmatmul.bf16.gmra.mxu0 %v795
  %v1152 = vpop.f32.mrf.mxu0
  %v1153 = vadd.f32 0.0, %v1152
  %v1154 = vpop.f32.mrf.mxu0
  %v1155 = vadd.f32 0.0, %v1154
  %1156 = vmatmul.bf16.gmra.mxu0 %v798
  %v1157 = vpop.f32.mrf.mxu0
  %v1158 = vadd.f32 0.0, %v1157
  %v1159 = vpop.f32.mrf.mxu0
  %v1160 = vadd.f32 0.0, %v1159
  %1161 = vmatmul.bf16.gmra.mxu0 %v801
  %v1162 = vpop.f32.mrf.mxu0
  %v1163 = vadd.f32 0.0, %v1162
  %v1164 = vpop.f32.mrf.mxu0
  %v1165 = vadd.f32 0.0, %v1164
  %1166 = vmatmul.bf16.gmra.mxu0 %v804
  %v1167 = vpop.f32.mrf.mxu0
  %v1168 = vadd.f32 0.0, %v1167
  %v1169 = vpop.f32.mrf.mxu0
  %v1170 = vadd.f32 0.0, %v1169
  %1171 = vmatmul.bf16.gmra.mxu0 %v807
  %v1172 = vpop.f32.mrf.mxu0
  %v1173 = vadd.f32 0.0, %v1172
  %v1174 = vpop.f32.mrf.mxu0
  %v1175 = vadd.f32 0.0, %v1174
  %1176 = vmatmul.bf16.gmra.mxu0 %v810
  %v1177 = vpop.f32.mrf.mxu0
  %v1178 = vadd.f32 0.0, %v1177
  %v1179 = vpop.f32.mrf.mxu0
  %v1180 = vadd.f32 0.0, %v1179
  %1181 = vmatmul.bf16.gmra.mxu0 %v813
  %v1182 = vpop.f32.mrf.mxu0
  %v1183 = vadd.f32 0.0, %v1182
  %v1184 = vpop.f32.mrf.mxu0
  %v1185 = vadd.f32 0.0, %v1184
  %1186 = vmatmul.bf16.gmra.mxu0 %v816
  %v1187 = vpop.f32.mrf.mxu0
  %v1188 = vadd.f32 0.0, %v1187
  %v1189 = vpop.f32.mrf.mxu0
  %v1190 = vadd.f32 0.0, %v1189
  %1191 = vmatmul.bf16.gmra.mxu0 %v819
  %v1192 = vpop.f32.mrf.mxu0
  %v1193 = vadd.f32 0.0, %v1192
  %v1194 = vpop.f32.mrf.mxu0
  %v1195 = vadd.f32 0.0, %v1194
  %1196 = vmatmul.bf16.gmra.mxu0 %v822
  %v1197 = vpop.f32.mrf.mxu0
  %v1198 = vadd.f32 0.0, %v1197
  %v1199 = vpop.f32.mrf.mxu0
  %v1200 = vadd.f32 0.0, %v1199
  %1201 = vmatmul.bf16.gmra.mxu0 %v825
  %v1202 = vpop.f32.mrf.mxu0
  %v1203 = vadd.f32 0.0, %v1202
  %v1204 = vpop.f32.mrf.mxu0
  %v1205 = vadd.f32 0.0, %v1204
  %1206 = vmatmul.bf16.gmra.mxu0 %v828
  %v1207 = vpop.f32.mrf.mxu0
  %v1208 = vadd.f32 0.0, %v1207
  %v1209 = vpop.f32.mrf.mxu0
  %v1210 = vadd.f32 0.0, %v1209
  %1211 = vmatmul.bf16.gmra.mxu0 %v831
  %v1212 = vpop.f32.mrf.mxu0
  %v1213 = vadd.f32 0.0, %v1212
  %v1214 = vpop.f32.mrf.mxu0
  %v1215 = vadd.f32 0.0, %v1214
  %1216 = vmatmul.bf16.gmra.mxu0 %v834
  %v1217 = vpop.f32.mrf.mxu0
  %v1218 = vadd.f32 0.0, %v1217
  %v1219 = vpop.f32.mrf.mxu0
  %v1220 = vadd.f32 0.0, %v1219
  %1221 = vmatmul.bf16.gmra.mxu0 %v837
  %v1222 = vpop.f32.mrf.mxu0
  %v1223 = vadd.f32 0.0, %v1222
  %v1224 = vpop.f32.mrf.mxu0
  %v1225 = vadd.f32 0.0, %v1224
  %1226 = vmatmul.bf16.gmra.mxu0 %v840
  %v1227 = vpop.f32.mrf.mxu0
  %v1228 = vadd.f32 0.0, %v1227
  %v1229 = vpop.f32.mrf.mxu0
  %v1230 = vadd.f32 0.0, %v1229
  %1231 = vmatmul.bf16.gmra.mxu0 %v843
  %v1232 = vpop.f32.mrf.mxu0
  %v1233 = vadd.f32 0.0, %v1232
  %v1234 = vpop.f32.mrf.mxu0
  %v1235 = vadd.f32 0.0, %v1234
  %1236 = vmatmul.bf16.gmra.mxu0 %v846
  %v1237 = vpop.f32.mrf.mxu0
  %v1238 = vadd.f32 0.0, %v1237
  %v1239 = vpop.f32.mrf.mxu0
  %v1240 = vadd.f32 0.0, %v1239
  %1241 = vmatmul.bf16.gmra.mxu0 %v849
  %v1242 = vpop.f32.mrf.mxu0
  %v1243 = vadd.f32 0.0, %v1242
  %v1244 = vpop.f32.mrf.mxu0
  %v1245 = vadd.f32 0.0, %v1244
  %1246 = vmatmul.bf16.gmra.mxu0 %v852
  %v1247 = vpop.f32.mrf.mxu0
  %v1248 = vadd.f32 0.0, %v1247
  %v1249 = vpop.f32.mrf.mxu0
  %v1250 = vadd.f32 0.0, %v1249
  %1251 = vmatmul.bf16.gmra.mxu0 %v855
  %v1252 = vpop.f32.mrf.mxu0
  %v1253 = vadd.f32 0.0, %v1252
  %v1254 = vpop.f32.mrf.mxu0
  %v1255 = vadd.f32 0.0, %v1254
  %1256 = vmatmul.bf16.gmra.mxu0 %v858
  %v1257 = vpop.f32.mrf.mxu0
  %v1258 = vadd.f32 0.0, %v1257
  %v1259 = vpop.f32.mrf.mxu0
  %v1260 = vadd.f32 0.0, %v1259
  %1261 = vmatmul.bf16.gmra.mxu0 %v861
  %v1262 = vpop.f32.mrf.mxu0
  %v1263 = vadd.f32 0.0, %v1262
  %v1264 = vpop.f32.mrf.mxu0
  %v1265 = vadd.f32 0.0, %v1264
  %1266 = vmatmul.bf16.gmra.mxu0 %v864
  %v1267 = vpop.f32.mrf.mxu0
  %v1268 = vadd.f32 0.0, %v1267
  %v1269 = vpop.f32.mrf.mxu0
  %v1270 = vadd.f32 0.0, %v1269
  %1271 = vmatmul.bf16.gmra.mxu0 %v867
  %v1272 = vpop.f32.mrf.mxu0
  %v1273 = vadd.f32 0.0, %v1272
  %v1274 = vpop.f32.mrf.mxu0
  %v1275 = vadd.f32 0.0, %v1274
  %1276 = vmatmul.bf16.gmra.mxu0 %v870
  %v1277 = vpop.f32.mrf.mxu0
  %v1278 = vadd.f32 0.0, %v1277
  %v1279 = vpop.f32.mrf.mxu0
  %v1280 = vadd.f32 0.0, %v1279
  %1281 = vmatmul.bf16.gmra.mxu0 %v873
  %v1282 = vpop.f32.mrf.mxu0
  %v1283 = vadd.f32 0.0, %v1282
  %v1284 = vpop.f32.mrf.mxu0
  %v1285 = vadd.f32 0.0, %v1284
  %1286 = vmatmul.bf16.gmra.mxu0 %v876
  %v1287 = vpop.f32.mrf.mxu0
  %v1288 = vadd.f32 0.0, %v1287
  %v1289 = vpop.f32.mrf.mxu0
  %v1290 = vadd.f32 0.0, %v1289
  %1291 = vmatmul.bf16.gmra.mxu0 %v879
  %v1292 = vpop.f32.mrf.mxu0
  %v1293 = vadd.f32 0.0, %v1292
  %v1294 = vpop.f32.mrf.mxu0
  %v1295 = vadd.f32 0.0, %v1294
  %1296 = vmatmul.bf16.gmra.mxu0 %v882
  %v1297 = vpop.f32.mrf.mxu0
  %v1298 = vadd.f32 0.0, %v1297
  %v1299 = vpop.f32.mrf.mxu0
  %v1300 = vadd.f32 0.0, %v1299
  %1301 = vmatmul.bf16.gmra.mxu0 %v885
  %v1302 = vpop.f32.mrf.mxu0
  %v1303 = vadd.f32 0.0, %v1302
  %v1304 = vpop.f32.mrf.mxu0
  %v1305 = vadd.f32 0.0, %v1304
  %1306 = vmatmul.bf16.gmra.mxu0 %v888
  %v1307 = vpop.f32.mrf.mxu0
  %v1308 = vadd.f32 0.0, %v1307
  %v1309 = vpop.f32.mrf.mxu0
  %v1310 = vadd.f32 0.0, %v1309
  %1311 = vmatmul.bf16.gmra.mxu0 %v891
  %v1312 = vpop.f32.mrf.mxu0
  %v1313 = vadd.f32 0.0, %v1312
  %v1314 = vpop.f32.mrf.mxu0
  %v1315 = vadd.f32 0.0, %v1314
  %1316 = vmatmul.bf16.gmra.mxu0 %v894
  %v1317 = vpop.f32.mrf.mxu0
  %v1318 = vadd.f32 0.0, %v1317
  %v1319 = vpop.f32.mrf.mxu0
  %v1320 = vadd.f32 0.0, %v1319
  %1321 = vmatmul.bf16.gmra.mxu0 %v897
  %v1322 = vpop.f32.mrf.mxu0
  %v1323 = vadd.f32 0.0, %v1322
  %v1324 = vpop.f32.mrf.mxu0
  %v1325 = vadd.f32 0.0, %v1324
  %1326 = vmatmul.bf16.gmra.mxu0 %v900
  %v1327 = vpop.f32.mrf.mxu0
  %v1328 = vadd.f32 0.0, %v1327
  %v1329 = vpop.f32.mrf.mxu0
  %v1330 = vadd.f32 0.0, %v1329
  %1331 = vmatmul.bf16.gmra.mxu0 %v903
  %v1332 = vpop.f32.mrf.mxu0
  %v1333 = vadd.f32 0.0, %v1332
  %v1334 = vpop.f32.mrf.mxu0
  %v1335 = vadd.f32 0.0, %v1334
  %1336 = vmatmul.bf16.gmra.mxu0 %v906
  %v1337 = vpop.f32.mrf.mxu0
  %v1338 = vadd.f32 0.0, %v1337
  %v1339 = vpop.f32.mrf.mxu0
  %v1340 = vadd.f32 0.0, %v1339
  %1341 = vmatmul.bf16.gmra.mxu0 %v909
  %v1342 = vpop.f32.mrf.mxu0
  %v1343 = vadd.f32 0.0, %v1342
  %v1344 = vpop.f32.mrf.mxu0
  %v1345 = vadd.f32 0.0, %v1344
  %1346 = vmatmul.bf16.gmra.mxu0 %v912
  %v1347 = vpop.f32.mrf.mxu0
  %v1348 = vadd.f32 0.0, %v1347
  %v1349 = vpop.f32.mrf.mxu0
  %v1350 = vadd.f32 0.0, %v1349
  %1351 = vmatmul.bf16.gmra.mxu0 %v915
  %v1352 = vpop.f32.mrf.mxu0
  %v1353 = vadd.f32 0.0, %v1352
  %v1354 = vpop.f32.mrf.mxu0
  %v1355 = vadd.f32 0.0, %v1354
  %1356 = vmatmul.bf16.gmra.mxu0 %v918
  %v1357 = vpop.f32.mrf.mxu0
  %v1358 = vadd.f32 0.0, %v1357
  %v1359 = vpop.f32.mrf.mxu0
  %v1360 = vadd.f32 0.0, %v1359
  %1361 = vmatmul.bf16.gmra.mxu0 %v921
  %v1362 = vpop.f32.mrf.mxu0
  %v1363 = vadd.f32 0.0, %v1362
  %v1364 = vpop.f32.mrf.mxu0
  %v1365 = vadd.f32 0.0, %v1364
  %1366 = vmatmul.bf16.gmra.mxu0 %v924
  %v1367 = vpop.f32.mrf.mxu0
  %v1368 = vadd.f32 0.0, %v1367
  %v1369 = vpop.f32.mrf.mxu0
  %v1370 = vadd.f32 0.0, %v1369
  %1371 = vmatmul.bf16.gmra.mxu0 %v927
  %v1372 = vpop.f32.mrf.mxu0
  %v1373 = vadd.f32 0.0, %v1372
  %v1374 = vpop.f32.mrf.mxu0
  %v1375 = vadd.f32 0.0, %v1374
  %1376 = vmatmul.bf16.gmra.mxu0 %v930
  %v1377 = vpop.f32.mrf.mxu0
  %v1378 = vadd.f32 0.0, %v1377
  %v1379 = vpop.f32.mrf.mxu0
  %v1380 = vadd.f32 0.0, %v1379
  %1381 = vmatmul.bf16.gmra.mxu0 %v933
  %v1382 = vpop.f32.mrf.mxu0
  %v1383 = vadd.f32 0.0, %v1382
  %v1384 = vpop.f32.mrf.mxu0
  %v1385 = vadd.f32 0.0, %v1384
  %1386 = vmatmul.bf16.gmra.mxu0 %v936
  %v1387 = vpop.f32.mrf.mxu0
  %v1388 = vadd.f32 0.0, %v1387
  %v1389 = vpop.f32.mrf.mxu0
  %v1390 = vadd.f32 0.0, %v1389
  %1391 = vmatmul.bf16.gmra.mxu0 %v939
  %v1392 = vpop.f32.mrf.mxu0
  %v1393 = vadd.f32 0.0, %v1392
  %v1394 = vpop.f32.mrf.mxu0
  %v1395 = vadd.f32 0.0, %v1394
  %1396 = vmatmul.bf16.gmra.mxu0 %v942
  %v1397 = vpop.f32.mrf.mxu0
  %v1398 = vadd.f32 0.0, %v1397
  %v1399 = vpop.f32.mrf.mxu0
  %v1400 = vadd.f32 0.0, %v1399
  %1401 = vmatmul.bf16.gmra.mxu0 %v945
  %v1402 = vpop.f32.mrf.mxu0
  %v1403 = vadd.f32 0.0, %v1402
  %v1404 = vpop.f32.mrf.mxu0
  %v1405 = vadd.f32 0.0, %v1404
  %1406 = vmatmul.bf16.gmra.mxu0 %v948
  %v1407 = vpop.f32.mrf.mxu0
  %v1408 = vadd.f32 0.0, %v1407
  %v1409 = vpop.f32.mrf.mxu0
  %v1410 = vadd.f32 0.0, %v1409
  %1411 = vmatmul.bf16.gmra.mxu0 %v951
  %v1412 = vpop.f32.mrf.mxu0
  %v1413 = vadd.f32 0.0, %v1412
  %v1414 = vpop.f32.mrf.mxu0
  %v1415 = vadd.f32 0.0, %v1414
  %1416 = vmatmul.bf16.gmra.mxu0 %v954
  %v1417 = vpop.f32.mrf.mxu0
  %v1418 = vadd.f32 0.0, %v1417
  %v1419 = vpop.f32.mrf.mxu0
  %v1420 = vadd.f32 0.0, %v1419
  %1421 = vmatmul.bf16.gmra.mxu0 %v957
  %v1422 = vpop.f32.mrf.mxu0
  %v1423 = vadd.f32 0.0, %v1422
  %v1424 = vpop.f32.mrf.mxu0
  %v1425 = vadd.f32 0.0, %v1424
  %1426 = vmatmul.bf16.gmra.mxu0 %v960
  %v1427 = vpop.f32.mrf.mxu0
  %v1428 = vadd.f32 0.0, %v1427
  %v1429 = vpop.f32.mrf.mxu0
  %v1430 = vadd.f32 0.0, %v1429
  %1431 = vmatmul.bf16.gmra.mxu0 %v963
  %v1432 = vpop.f32.mrf.mxu0
  %v1433 = vadd.f32 0.0, %v1432
  %v1434 = vpop.f32.mrf.mxu0
  %v1435 = vadd.f32 0.0, %v1434
  %1436 = vmatmul.bf16.gmra.mxu0 %v966
  %v1437 = vpop.f32.mrf.mxu0
  %v1438 = vadd.f32 0.0, %v1437
  %v1439 = vpop.f32.mrf.mxu0
  %v1440 = vadd.f32 0.0, %v1439
  %1441 = vmatmul.bf16.gmra.mxu0 %v969
  %v1442 = vpop.f32.mrf.mxu0
  %v1443 = vadd.f32 0.0, %v1442
  %v1444 = vpop.f32.mrf.mxu0
  %v1445 = vadd.f32 0.0, %v1444
  %1446 = vmatmul.bf16.gmra.mxu0 %v972
  %v1447 = vpop.f32.mrf.mxu0
  %v1448 = vadd.f32 0.0, %v1447
  %v1449 = vpop.f32.mrf.mxu0
  %v1450 = vadd.f32 0.0, %v1449
  %1451 = vmatmul.bf16.gmra.mxu0 %v975
  %v1452 = vpop.f32.mrf.mxu0
  %v1453 = vadd.f32 0.0, %v1452
  %v1454 = vpop.f32.mrf.mxu0
  %v1455 = vadd.f32 0.0, %v1454
  %1456 = vmatmul.bf16.gmra.mxu0 %v978
  %v1457 = vpop.f32.mrf.mxu0
  %v1458 = vadd.f32 0.0, %v1457
  %v1459 = vpop.f32.mrf.mxu0
  %v1460 = vadd.f32 0.0, %v1459
  %1461 = vmatmul.bf16.gmra.mxu0 %v981
  %v1462 = vpop.f32.mrf.mxu0
  %v1463 = vadd.f32 0.0, %v1462
  %v1464 = vpop.f32.mrf.mxu0
  %v1465 = vadd.f32 0.0, %v1464
  %1466 = vmatmul.bf16.gmra.mxu0 %v984
  %v1467 = vpop.f32.mrf.mxu0
  %v1468 = vadd.f32 0.0, %v1467
  %v1469 = vpop.f32.mrf.mxu0
  %v1470 = vadd.f32 0.0, %v1469
  %1471 = vmatmul.bf16.gmra.mxu0 %v987
  %v1472 = vpop.f32.mrf.mxu0
  %v1473 = vadd.f32 0.0, %v1472
  %v1474 = vpop.f32.mrf.mxu0
  %v1475 = vadd.f32 0.0, %v1474
  %1476 = vmatmul.bf16.gmra.mxu0 %v990
  %v1477 = vpop.f32.mrf.mxu0
  %v1478 = vadd.f32 0.0, %v1477
  %v1479 = vpop.f32.mrf.mxu0
  %v1480 = vadd.f32 0.0, %v1479
  %1481 = vmatmul.bf16.gmra.mxu0 %v993
  %v1482 = vpop.f32.mrf.mxu0
  %v1483 = vadd.f32 0.0, %v1482
  %v1484 = vpop.f32.mrf.mxu0
  %v1485 = vadd.f32 0.0, %v1484
  %1486 = vmatmul.bf16.gmra.mxu0 %v996
  %v1487 = vpop.f32.mrf.mxu0
  %v1488 = vadd.f32 0.0, %v1487
  %v1489 = vpop.f32.mrf.mxu0
  %v1490 = vadd.f32 0.0, %v1489
  %1491 = vmatmul.bf16.gmra.mxu0 %v999
  %v1492 = vpop.f32.mrf.mxu0
  %v1493 = vadd.f32 0.0, %v1492
  %v1494 = vpop.f32.mrf.mxu0
  %v1495 = vadd.f32 0.0, %v1494
  %1496 = vmatmul.bf16.gmra.mxu0 %v1002
  %v1497 = vpop.f32.mrf.mxu0
  %v1498 = vadd.f32 0.0, %v1497
  %v1499 = vpop.f32.mrf.mxu0
  %v1500 = vadd.f32 0.0, %v1499
  %1501 = vmatmul.bf16.gmra.mxu0 %v1005
  %v1502 = vpop.f32.mrf.mxu0
  %v1503 = vadd.f32 0.0, %v1502
  %v1504 = vpop.f32.mrf.mxu0
  %v1505 = vadd.f32 0.0, %v1504
  %1506 = vmatmul.bf16.gmra.mxu0 %v1008
  %v1507 = vpop.f32.mrf.mxu0
  %v1508 = vadd.f32 0.0, %v1507
  %v1509 = vpop.f32.mrf.mxu0
  %v1510 = vadd.f32 0.0, %v1509
  %1511 = vmatmul.bf16.gmra.mxu0 %v1011
  %v1512 = vpop.f32.mrf.mxu0
  %v1513 = vadd.f32 0.0, %v1512
  %v1514 = vpop.f32.mrf.mxu0
  %v1515 = vadd.f32 0.0, %v1514
  %1516 = vmatmul.bf16.gmra.mxu0 %v1014
  %v1517 = vpop.f32.mrf.mxu0
  %v1518 = vadd.f32 0.0, %v1517
  %v1519 = vpop.f32.mrf.mxu0
  %v1520 = vadd.f32 0.0, %v1519
  %1521 = vmatmul.bf16.gmra.mxu0 %v1017
  %v1522 = vpop.f32.mrf.mxu0
  %v1523 = vadd.f32 0.0, %v1522
  %v1524 = vpop.f32.mrf.mxu0
  %v1525 = vadd.f32 0.0, %v1524
  %1526 = vmatmul.bf16.gmra.mxu0 %v1020
  %v1527 = vpop.f32.mrf.mxu0
  %v1528 = vadd.f32 0.0, %v1527
  %v1529 = vpop.f32.mrf.mxu0
  %v1530 = vadd.f32 0.0, %v1529
  %1531 = vmatmul.bf16.gmra.mxu0 %v1023
  %v1532 = vpop.f32.mrf.mxu0
  %v1533 = vadd.f32 0.0, %v1532
  %v1534 = vpop.f32.mrf.mxu0
  %v1535 = vadd.f32 0.0, %v1534
  %1536 = vmatmul.bf16.gmra.mxu0 %v1026
  %v1537 = vpop.f32.mrf.mxu0
  %v1538 = vadd.f32 0.0, %v1537
  %v1539 = vpop.f32.mrf.mxu0
  %v1540 = vadd.f32 0.0, %v1539
  %1541 = vmatmul.bf16.gmra.mxu0 %v1029
  %v1542 = vpop.f32.mrf.mxu0
  %v1543 = vadd.f32 0.0, %v1542
  %v1544 = vpop.f32.mrf.mxu0
  %v1545 = vadd.f32 0.0, %v1544
  %1546 = vdwg.mxu0
  %v1547 = vmax.f32 %v1048, %v1173
  %v1548 = vmax.f32 %v1050, %v1175
  %v1549 = vmax.f32 %v1053, %v1178
  %v1550 = vmax.f32 %v1055, %v1180
  %v1551 = vmax.f32 %v1058, %v1183
  %v1552 = vmax.f32 %v1060, %v1185
  %v1553 = vmax.f32 %v1063, %v1188
  %v1554 = vmax.f32 %v1065, %v1190
  %v1555 = vmax.f32 %v1068, %v1193
  %v1556 = vmax.f32 %v1070, %v1195
  %v1557 = vmax.f32 %v1073, %v1198
  %v1558 = vmax.f32 %v1075, %v1200
  %v1559 = vmax.f32 %v1078, %v1203
  %v1560 = vmax.f32 %v1080, %v1205
  %v1561 = vmax.f32 %v1083, %v1208
  %v1562 = vmax.f32 %v1085, %v1210
  %v1563 = vmax.f32 %v1088, %v1213
  %v1564 = vmax.f32 %v1090, %v1215
  %v1565 = vmax.f32 %v1093, %v1218
  %v1566 = vmax.f32 %v1095, %v1220
  %v1567 = vmax.f32 %v1098, %v1223
  %v1568 = vmax.f32 %v1100, %v1225
  %v1569 = vmax.f32 %v1103, %v1228
  %v1570 = vmax.f32 %v1105, %v1230
  %v1571 = vmax.f32 %v1108, %v1233
  %v1572 = vmax.f32 %v1110, %v1235
  %v1573 = vmax.f32 %v1113, %v1238
  %v1574 = vmax.f32 %v1115, %v1240
  %v1575 = vmax.f32 %v1118, %v1243
  %v1576 = vmax.f32 %v1120, %v1245
  %v1577 = vmax.f32 %v1123, %v1248
  %v1578 = vmax.f32 %v1125, %v1250
  %v1579 = vmax.f32 %v1128, %v1253
  %v1580 = vmax.f32 %v1130, %v1255
  %v1581 = vmax.f32 %v1133, %v1258
  %v1582 = vmax.f32 %v1135, %v1260
  %v1583 = vmax.f32 %v1138, %v1263
  %v1584 = vmax.f32 %v1140, %v1265
  %v1585 = vmax.f32 %v1143, %v1268
  %v1586 = vmax.f32 %v1145, %v1270
  %v1587 = vmax.f32 %v1148, %v1273
  %v1588 = vmax.f32 %v1150, %v1275
  %v1589 = vmax.f32 %v1153, %v1278
  %v1590 = vmax.f32 %v1155, %v1280
  %v1591 = vmax.f32 %v1158, %v1283
  %v1592 = vmax.f32 %v1160, %v1285
  %v1593 = vmax.f32 %v1163, %v1288
  %v1594 = vmax.f32 %v1165, %v1290
  %v1595 = vmax.f32 %v1168, %v1293
  %v1596 = vmax.f32 %v1170, %v1295
  %v1597 = vmax.f32 %v1298, %v1423
  %v1598 = vmax.f32 %v1300, %v1425
  %v1599 = vmax.f32 %v1303, %v1428
  %v1600 = vmax.f32 %v1305, %v1430
  %v1601 = vmax.f32 %v1308, %v1433
  %v1602 = vmax.f32 %v1310, %v1435
  %v1603 = vmax.f32 %v1313, %v1438
  %v1604 = vmax.f32 %v1315, %v1440
  %v1605 = vmax.f32 %v1318, %v1443
  %v1606 = vmax.f32 %v1320, %v1445
  %v1607 = vmax.f32 %v1323, %v1448
  %v1608 = vmax.f32 %v1325, %v1450
  %v1609 = vmax.f32 %v1328, %v1453
  %v1610 = vmax.f32 %v1330, %v1455
  %v1611 = vmax.f32 %v1333, %v1458
  %v1612 = vmax.f32 %v1335, %v1460
  %v1613 = vmax.f32 %v1338, %v1463
  %v1614 = vmax.f32 %v1340, %v1465
  %v1615 = vmax.f32 %v1343, %v1468
  %v1616 = vmax.f32 %v1345, %v1470
  %v1617 = vmax.f32 %v1348, %v1473
  %v1618 = vmax.f32 %v1350, %v1475
  %v1619 = vmax.f32 %v1353, %v1478
  %v1620 = vmax.f32 %v1355, %v1480
  %v1621 = vmax.f32 %v1358, %v1483
  %v1622 = vmax.f32 %v1360, %v1485
  %v1623 = vmax.f32 %v1363, %v1488
  %v1624 = vmax.f32 %v1365, %v1490
  %v1625 = vmax.f32 %v1368, %v1493
  %v1626 = vmax.f32 %v1370, %v1495
  %v1627 = vmax.f32 %v1373, %v1498
  %v1628 = vmax.f32 %v1375, %v1500
  %v1629 = vmax.f32 %v1378, %v1503
  %v1630 = vmax.f32 %v1380, %v1505
  %v1631 = vmax.f32 %v1383, %v1508
  %v1632 = vmax.f32 %v1385, %v1510
  %v1633 = vmax.f32 %v1388, %v1513
  %v1634 = vmax.f32 %v1390, %v1515
  %v1635 = vmax.f32 %v1393, %v1518
  %v1636 = vmax.f32 %v1395, %v1520
  %v1637 = vmax.f32 %v1398, %v1523
  %v1638 = vmax.f32 %v1400, %v1525
  %v1639 = vmax.f32 %v1403, %v1528
  %v1640 = vmax.f32 %v1405, %v1530
  %v1641 = vmax.f32 %v1408, %v1533
  %v1642 = vmax.f32 %v1410, %v1535
  %v1643 = vmax.f32 %v1413, %v1538
  %v1644 = vmax.f32 %v1415, %v1540
  %v1645 = vmax.f32 %v1418, %v1543
  %v1646 = vmax.f32 %v1420, %v1545
  %v1647 = vmax.f32 %v1547, %v1597
  %v1648 = vmax.f32 %v1548, %v1598
  %v1649 = vmax.f32 %v1549, %v1599
  %v1650 = vmax.f32 %v1550, %v1600
  %v1651 = vmax.f32 %v1551, %v1601
  %v1652 = vmax.f32 %v1552, %v1602
  %v1653 = vmax.f32 %v1553, %v1603
  %v1654 = vmax.f32 %v1554, %v1604
  %v1655 = vmax.f32 %v1555, %v1605
  %v1656 = vmax.f32 %v1556, %v1606
  %v1657 = vmax.f32 %v1557, %v1607
  %v1658 = vmax.f32 %v1558, %v1608
  %v1659 = vmax.f32 %v1559, %v1609
  %v1660 = vmax.f32 %v1560, %v1610
  %v1661 = vmax.f32 %v1561, %v1611
  %v1662 = vmax.f32 %v1562, %v1612
  %v1663 = vmax.f32 %v1563, %v1613
  %v1664 = vmax.f32 %v1564, %v1614
  %v1665 = vmax.f32 %v1565, %v1615
  %v1666 = vmax.f32 %v1566, %v1616
  %v1667 = vmax.f32 %v1567, %v1617
  %v1668 = vmax.f32 %v1568, %v1618
  %v1669 = vmax.f32 %v1569, %v1619
  %v1670 = vmax.f32 %v1570, %v1620
  %v1671 = vmax.f32 %v1571, %v1621
  %v1672 = vmax.f32 %v1572, %v1622
  %v1673 = vmax.f32 %v1573, %v1623
  %v1674 = vmax.f32 %v1574, %v1624
  %v1675 = vmax.f32 %v1575, %v1625
  %v1676 = vmax.f32 %v1576, %v1626
  %v1677 = vmax.f32 %v1577, %v1627
  %v1678 = vmax.f32 %v1578, %v1628
  %v1679 = vmax.f32 %v1579, %v1629
  %v1680 = vmax.f32 %v1580, %v1630
  %v1681 = vmax.f32 %v1581, %v1631
  %v1682 = vmax.f32 %v1582, %v1632
  %v1683 = vmax.f32 %v1583, %v1633
  %v1684 = vmax.f32 %v1584, %v1634
  %v1685 = vmax.f32 %v1585, %v1635
  %v1686 = vmax.f32 %v1586, %v1636
  %v1687 = vmax.f32 %v1587, %v1637
  %v1688 = vmax.f32 %v1588, %v1638
  %v1689 = vmax.f32 %v1589, %v1639
  %v1690 = vmax.f32 %v1590, %v1640
  %v1691 = vmax.f32 %v1591, %v1641
  %v1692 = vmax.f32 %v1592, %v1642
  %v1693 = vmax.f32 %v1593, %v1643
  %v1694 = vmax.f32 %v1594, %v1644
  %v1695 = vmax.f32 %v1595, %v1645
  %v1696 = vmax.f32 %v1596, %v1646
  %v1697 = vld [vmem:[%s2] sm:$0x1]
  %v1699 = vperm.slane %v1697, 0
  %v1701 = vadd.f32 %v1647, %v1699
  %v1702 = vadd.f32 %v1648, %v1699
  %v1703 = vadd.f32 %v1649, %v1699
  %v1704 = vadd.f32 %v1650, %v1699
  %v1705 = vadd.f32 %v1651, %v1699
  %v1706 = vadd.f32 %v1652, %v1699
  %v1707 = vadd.f32 %v1653, %v1699
  %v1708 = vadd.f32 %v1654, %v1699
  %v1709 = vadd.f32 %v1655, %v1699
  %v1710 = vadd.f32 %v1656, %v1699
  %v1711 = vadd.f32 %v1657, %v1699
  %v1712 = vadd.f32 %v1658, %v1699
  %v1713 = vadd.f32 %v1659, %v1699
  %v1714 = vadd.f32 %v1660, %v1699
  %v1715 = vadd.f32 %v1661, %v1699
  %v1716 = vadd.f32 %v1662, %v1699
  %v1717 = vadd.f32 %v1663, %v1699
  %v1718 = vadd.f32 %v1664, %v1699
  %v1719 = vadd.f32 %v1665, %v1699
  %v1720 = vadd.f32 %v1666, %v1699
  %v1721 = vadd.f32 %v1667, %v1699
  %v1722 = vadd.f32 %v1668, %v1699
  %v1723 = vadd.f32 %v1669, %v1699
  %v1724 = vadd.f32 %v1670, %v1699
  %v1725 = vadd.f32 %v1671, %v1699
  %v1726 = vadd.f32 %v1672, %v1699
  %v1727 = vadd.f32 %v1673, %v1699
  %v1728 = vadd.f32 %v1674, %v1699
  %v1729 = vadd.f32 %v1675, %v1699
  %v1730 = vadd.f32 %v1676, %v1699
  %v1731 = vadd.f32 %v1677, %v1699
  %v1732 = vadd.f32 %v1678, %v1699
  %v1733 = vadd.f32 %v1679, %v1699
  %v1734 = vadd.f32 %v1680, %v1699
  %v1735 = vadd.f32 %v1681, %v1699
  %v1736 = vadd.f32 %v1682, %v1699
  %v1737 = vadd.f32 %v1683, %v1699
  %v1738 = vadd.f32 %v1684, %v1699
  %v1739 = vadd.f32 %v1685, %v1699
  %v1740 = vadd.f32 %v1686, %v1699
  %v1741 = vadd.f32 %v1687, %v1699
  %v1742 = vadd.f32 %v1688, %v1699
  %v1743 = vadd.f32 %v1689, %v1699
  %v1744 = vadd.f32 %v1690, %v1699
  %v1745 = vadd.f32 %v1691, %v1699
  %v1746 = vadd.f32 %v1692, %v1699
  %v1747 = vadd.f32 %v1693, %v1699
  %v1748 = vadd.f32 %v1694, %v1699
  %v1749 = vadd.f32 %v1695, %v1699
  %v1750 = vadd.f32 %v1696, %v1699
  %v1751 = vmax.f32 %v1701, 0.0
  %v1752 = vmax.f32 %v1702, 0.0
  %v1753 = vmax.f32 %v1703, 0.0
  %v1754 = vmax.f32 %v1704, 0.0
  %v1755 = vmax.f32 %v1705, 0.0
  %v1756 = vmax.f32 %v1706, 0.0
  %v1757 = vmax.f32 %v1707, 0.0
  %v1758 = vmax.f32 %v1708, 0.0
  %v1759 = vmax.f32 %v1709, 0.0
  %v1760 = vmax.f32 %v1710, 0.0
  %v1761 = vmax.f32 %v1711, 0.0
  %v1762 = vmax.f32 %v1712, 0.0
  %v1763 = vmax.f32 %v1713, 0.0
  %v1764 = vmax.f32 %v1714, 0.0
  %v1765 = vmax.f32 %v1715, 0.0
  %v1766 = vmax.f32 %v1716, 0.0
  %v1767 = vmax.f32 %v1717, 0.0
  %v1768 = vmax.f32 %v1718, 0.0
  %v1769 = vmax.f32 %v1719, 0.0
  %v1770 = vmax.f32 %v1720, 0.0
  %v1771 = vmax.f32 %v1721, 0.0
  %v1772 = vmax.f32 %v1722, 0.0
  %v1773 = vmax.f32 %v1723, 0.0
  %v1774 = vmax.f32 %v1724, 0.0
  %v1775 = vmax.f32 %v1725, 0.0
  %v1776 = vmax.f32 %v1726, 0.0
  %v1777 = vmax.f32 %v1727, 0.0
  %v1778 = vmax.f32 %v1728, 0.0
  %v1779 = vmax.f32 %v1729, 0.0
  %v1780 = vmax.f32 %v1730, 0.0
  %v1781 = vmax.f32 %v1731, 0.0
  %v1782 = vmax.f32 %v1732, 0.0
  %v1783 = vmax.f32 %v1733, 0.0
  %v1784 = vmax.f32 %v1734, 0.0
  %v1785 = vmax.f32 %v1735, 0.0
  %v1786 = vmax.f32 %v1736, 0.0
  %v1787 = vmax.f32 %v1737, 0.0
  %v1788 = vmax.f32 %v1738, 0.0
  %v1789 = vmax.f32 %v1739, 0.0
  %v1790 = vmax.f32 %v1740, 0.0
  %v1791 = vmax.f32 %v1741, 0.0
  %v1792 = vmax.f32 %v1742, 0.0
  %v1793 = vmax.f32 %v1743, 0.0
  %v1794 = vmax.f32 %v1744, 0.0
  %v1795 = vmax.f32 %v1745, 0.0
  %v1796 = vmax.f32 %v1746, 0.0
  %v1797 = vmax.f32 %v1747, 0.0
  %v1798 = vmax.f32 %v1748, 0.0
  %v1799 = vmax.f32 %v1749, 0.0
  %v1800 = vmax.f32 %v1750, 0.0
  %v1801 = vpack.c.bf16 %v1751, %v1751
  %v1802 = vpack.c.bf16 %v1752, %v1752
  %v1803 = vpack.c.bf16 %v1753, %v1753
  %v1804 = vpack.c.bf16 %v1754, %v1754
  %v1805 = vpack.c.bf16 %v1755, %v1755
  %v1806 = vpack.c.bf16 %v1756, %v1756
  %v1807 = vpack.c.bf16 %v1757, %v1757
  %v1808 = vpack.c.bf16 %v1758, %v1758
  %v1809 = vpack.c.bf16 %v1759, %v1759
  %v1810 = vpack.c.bf16 %v1760, %v1760
  %v1811 = vpack.c.bf16 %v1761, %v1761
  %v1812 = vpack.c.bf16 %v1762, %v1762
  %v1813 = vpack.c.bf16 %v1763, %v1763
  %v1814 = vpack.c.bf16 %v1764, %v1764
  %v1815 = vpack.c.bf16 %v1765, %v1765
  %v1816 = vpack.c.bf16 %v1766, %v1766
  %v1817 = vpack.c.bf16 %v1767, %v1767
  %v1818 = vpack.c.bf16 %v1768, %v1768
  %v1819 = vpack.c.bf16 %v1769, %v1769
  %v1820 = vpack.c.bf16 %v1770, %v1770
  %v1821 = vpack.c.bf16 %v1771, %v1771
  %v1822 = vpack.c.bf16 %v1772, %v1772
  %v1823 = vpack.c.bf16 %v1773, %v1773
  %v1824 = vpack.c.bf16 %v1774, %v1774
  %v1825 = vpack.c.bf16 %v1775, %v1775
  %v1826 = vpack.c.bf16 %v1776, %v1776
  %v1827 = vpack.c.bf16 %v1777, %v1777
  %v1828 = vpack.c.bf16 %v1778, %v1778
  %v1829 = vpack.c.bf16 %v1779, %v1779
  %v1830 = vpack.c.bf16 %v1780, %v1780
  %v1831 = vpack.c.bf16 %v1781, %v1781
  %v1832 = vpack.c.bf16 %v1782, %v1782
  %v1833 = vpack.c.bf16 %v1783, %v1783
  %v1834 = vpack.c.bf16 %v1784, %v1784
  %v1835 = vpack.c.bf16 %v1785, %v1785
  %v1836 = vpack.c.bf16 %v1786, %v1786
  %v1837 = vpack.c.bf16 %v1787, %v1787
  %v1838 = vpack.c.bf16 %v1788, %v1788
  %v1839 = vpack.c.bf16 %v1789, %v1789
  %v1840 = vpack.c.bf16 %v1790, %v1790
  %v1841 = vpack.c.bf16 %v1791, %v1791
  %v1842 = vpack.c.bf16 %v1792, %v1792
  %v1843 = vpack.c.bf16 %v1793, %v1793
  %v1844 = vpack.c.bf16 %v1794, %v1794
  %v1845 = vpack.c.bf16 %v1795, %v1795
  %v1846 = vpack.c.bf16 %v1796, %v1796
  %v1847 = vpack.c.bf16 %v1797, %v1797
  %v1848 = vpack.c.bf16 %v1798, %v1798
  %v1849 = vpack.c.bf16 %v1799, %v1799
  %v1850 = vpack.c.bf16 %v1800, %v1800
  %1851 = vst [vmem:[%s3] sm:$0xf] %v1801
  %1852 = vst [vmem:[%s3 + $0x4] sm:$0xf] %v1802
  %1853 = vst [vmem:[%s3 + $0x8] sm:$0xf] %v1803
  %1854 = vst [vmem:[%s3 + $0xc] sm:$0xf] %v1804
  %1855 = vst [vmem:[%s3 + $0x10] sm:$0xf] %v1805
  %1856 = vst [vmem:[%s3 + $0x14] sm:$0xf] %v1806
  %1857 = vst [vmem:[%s3 + $0x18] sm:$0xf] %v1807
  %1858 = vst [vmem:[%s3 + $0x1c] sm:$0xf] %v1808
  %1859 = vst [vmem:[%s3 + $0x20] sm:$0xf] %v1809
  %1860 = vst [vmem:[%s3 + $0x24] sm:$0xf] %v1810
  %1861 = vst [vmem:[%s3 + $0x28] sm:$0xf] %v1811
  %1862 = vst [vmem:[%s3 + $0x2c] sm:$0xf] %v1812
  %1863 = vst [vmem:[%s3 + $0x30] sm:$0xf] %v1813
  %1864 = vst [vmem:[%s3 + $0x34] sm:$0xf] %v1814
  %1865 = vst [vmem:[%s3 + $0x38] sm:$0xf] %v1815
  %1866 = vst [vmem:[%s3 + $0x3c] sm:$0xf] %v1816
  %1867 = vst [vmem:[%s3 + $0x40] sm:$0xf] %v1817
  %1868 = vst [vmem:[%s3 + $0x44] sm:$0xf] %v1818
  %1869 = vst [vmem:[%s3 + $0x48] sm:$0xf] %v1819
  %1870 = vst [vmem:[%s3 + $0x4c] sm:$0xf] %v1820
  %1871 = vst [vmem:[%s3 + $0x50] sm:$0xf] %v1821
  %1872 = vst [vmem:[%s3 + $0x54] sm:$0xf] %v1822
  %1873 = vst [vmem:[%s3 + $0x58] sm:$0xf] %v1823
  %1874 = vst [vmem:[%s3 + $0x5c] sm:$0xf] %v1824
  %1875 = vst [vmem:[%s3 + $0x60] sm:$0xf] %v1825
  %1876 = vst [vmem:[%s3 + $0x64] sm:$0xf] %v1826
  %1877 = vst [vmem:[%s3 + $0x68] sm:$0xf] %v1827
  %1878 = vst [vmem:[%s3 + $0x6c] sm:$0xf] %v1828
  %1879 = vst [vmem:[%s3 + $0x70] sm:$0xf] %v1829
  %1880 = vst [vmem:[%s3 + $0x74] sm:$0xf] %v1830
  %1881 = vst [vmem:[%s3 + $0x78] sm:$0xf] %v1831
  %1882 = vst [vmem:[%s3 + $0x7c] sm:$0xf] %v1832
  %1883 = vst [vmem:[%s3 + $0x80] sm:$0xf] %v1833
  %1884 = vst [vmem:[%s3 + $0x84] sm:$0xf] %v1834
  %1885 = vst [vmem:[%s3 + $0x88] sm:$0xf] %v1835
  %1886 = vst [vmem:[%s3 + $0x8c] sm:$0xf] %v1836
  %1887 = vst [vmem:[%s3 + $0x90] sm:$0xf] %v1837
  %1888 = vst [vmem:[%s3 + $0x94] sm:$0xf] %v1838
  %1889 = vst [vmem:[%s3 + $0x98] sm:$0xf] %v1839
  %1890 = vst [vmem:[%s3 + $0x9c] sm:$0xf] %v1840
  %1891 = vst [vmem:[%s3 + $0xa0] sm:$0xf] %v1841
  %1892 = vst [vmem:[%s3 + $0xa4] sm:$0xf] %v1842
  %1893 = vst [vmem:[%s3 + $0xa8] sm:$0xf] %v1843
  %1894 = vst [vmem:[%s3 + $0xac] sm:$0xf] %v1844
  %1895 = vst [vmem:[%s3 + $0xb0] sm:$0xf] %v1845
  %1896 = vst [vmem:[%s3 + $0xb4] sm:$0xf] %v1846
  %1897 = vst [vmem:[%s3 + $0xb8] sm:$0xf] %v1847
  %1898 = vst [vmem:[%s3 + $0xbc] sm:$0xf] %v1848
  %1899 = vst [vmem:[%s3 + $0xc0] sm:$0xf] %v1849
  %1900 = vst [vmem:[%s3 + $0xc4] sm:$0xf] %v1850
  // Predicated region
  $region14: #{lenet5_forward.3} parent=0 // pred_check
    _
  $region15: #{lenet5_forward.3} parent=0 // pred_check_branch
    %1902 = sbr.rel (0) target = $region17
  $region16: #{lenet5_forward.3} parent=0 // pred_region
    _
  $region17: #{lenet5_forward.3} parent=0 // pred_fallthru
    _
  // Predicated region
  $region18: #{lenet5_forward.3} parent=0 // pred_check
    _
  $region19: #{lenet5_forward.3} parent=0 // pred_check_branch
    %1904 = sbr.rel (0) target = $region21
  $region20: #{lenet5_forward.3} parent=0 // pred_region
    _
  $region21: #{lenet5_forward.3} parent=0 // pred_fallthru
    _

// kernel: lenet5_forward.4
$region0: #{lenet5_forward.4}
  #allocation0 [shape = 'u32[]', space=smem, size = 0x4, offset = 0x4, fixed_abs, tag = 'smem constant byte address 0x4 - core index']
  #allocation1 [shape = 'u32[72,128]{1,0:T(1,128)}', space=vmem, size = 0x9000, scoped, tag = 'internal scratch']
  %s0 = inlined_call_operand.vmem [shape: bf16[256,150], index: 0, kind: input, shape index: {}]
  %s1 = inlined_call_operand.vmem [shape: bf16[150,128], index: 1, kind: input, shape index: {}]
  %s2 = inlined_call_operand.vmem [shape: f32[1,128], index: 2, kind: input, shape index: {}]
  %s3 = inlined_call_operand.vmem [shape: bf16[64,128], index: 3, kind: output, shape index: {}]
  %s4 = sld [smem:[#allocation0]]
  $region22: #{lenet5_forward.4} parent=0
    _
  %s6 = ssub.s32 1, %s4
  %s7 = scalar_select 0, %s6, %s4
  // Predicated region
  $region2: #{lenet5_forward.4} parent=0 // pred_check
    _
  $region3: #{lenet5_forward.4} parent=0 // pred_check_branch
    %9 = sbr.rel (0) target = $region5
  $region4: #{lenet5_forward.4} parent=0 // pred_region
    _
  $region5: #{lenet5_forward.4} parent=0 // pred_fallthru
    _
  // Predicated region
  $region6: #{lenet5_forward.4} parent=0 // pred_check
    _
  $region7: #{lenet5_forward.4} parent=0 // pred_check_branch
    %11 = sbr.rel (0) target = $region9
  $region8: #{lenet5_forward.4} parent=0 // pred_region
    _
  $region9: #{lenet5_forward.4} parent=0 // pred_fallthru
    _
  // Predicated region
  $region10: #{lenet5_forward.4} parent=0 // pred_check
    _
  $region11: #{lenet5_forward.4} parent=0 // pred_check_branch
    %13 = sbr.rel (0) target = $region13
  $region12: #{lenet5_forward.4} parent=0 // pred_region
    _
  $region13: #{lenet5_forward.4} parent=0 // pred_fallthru
    _
  %v15 = vld [vmem:[%s0] sm:$0xff]
  %v16 = vld [vmem:[%s0 + $0x8] sm:$0xff]
  %v17 = vld [vmem:[%s0 + $0x10] sm:$0xff]
  %v18 = vld [vmem:[%s0 + $0x18] sm:$0xff]
  %v19 = vld [vmem:[%s0 + $0x20] sm:$0xff]
  %v20 = vld [vmem:[%s0 + $0x28] sm:$0xff]
  %v21 = vld [vmem:[%s0 + $0x30] sm:$0xff]
  %v22 = vld [vmem:[%s0 + $0x38] sm:$0xff]
  %v23 = vld [vmem:[%s0 + $0x40] sm:$0xff]
  %v24 = vld [vmem:[%s0 + $0x48] sm:$0xff]
  %v25 = vld [vmem:[%s0 + $0x50] sm:$0xff]
  %v26 = vld [vmem:[%s0 + $0x58] sm:$0xff]
  %v27 = vld [vmem:[%s0 + $0x60] sm:$0xff]
  %v28 = vld [vmem:[%s0 + $0x68] sm:$0xff]
  %v29 = vld [vmem:[%s0 + $0x70] sm:$0xff]
  %v30 = vld [vmem:[%s0 + $0x78] sm:$0xff]
  %v31 = vld [vmem:[%s0 + $0x80] sm:$0xff]
  %v32 = vld [vmem:[%s0 + $0x88] sm:$0xff]
  %v33 = vld [vmem:[%s0 + $0x90] sm:$0xff]
  %v34 = vld [vmem:[%s0 + $0x98] sm:$0xff]
  %v35 = vld [vmem:[%s0 + $0xa0] sm:$0xff]
  %v36 = vld [vmem:[%s0 + $0xa8] sm:$0xff]
  %v37 = vld [vmem:[%s0 + $0xb0] sm:$0xff]
  %v38 = vld [vmem:[%s0 + $0xb8] sm:$0xff]
  %v39 = vld [vmem:[%s0 + $0xc0] sm:$0xff]
  %v40 = vld [vmem:[%s0 + $0xc8] sm:$0xff]
  %v41 = vld [vmem:[%s0 + $0xd0] sm:$0xff]
  %v42 = vld [vmem:[%s0 + $0xd8] sm:$0xff]
  %v43 = vld [vmem:[%s0 + $0xe0] sm:$0xff]
  %v44 = vld [vmem:[%s0 + $0xe8] sm:$0xff]
  %v45 = vld [vmem:[%s0 + $0xf0] sm:$0xff]
  %v46 = vld [vmem:[%s0 + $0xf8] sm:$0xff]
  %v47 = vld [vmem:[%s1] sm:$0xf]
  %v48 = vld [vmem:[%s1 + $0x4] sm:$0xf]
  %v49 = vld [vmem:[%s1 + $0x8] sm:$0xf]
  %v50 = vld [vmem:[%s1 + $0xc] sm:$0xf]
  %v51 = vld [vmem:[%s1 + $0x10] sm:$0xf]
  %v52 = vld [vmem:[%s1 + $0x14] sm:$0xf]
  %v53 = vld [vmem:[%s1 + $0x18] sm:$0xf]
  %v54 = vld [vmem:[%s1 + $0x1c] sm:$0xf]
  %v55 = vld [vmem:[%s1 + $0x20] sm:$0xf]
  %v56 = vld [vmem:[%s1 + $0x24] sm:$0xf]
  %v57 = vld [vmem:[%s1 + $0x28] sm:$0xf]
  %v58 = vld [vmem:[%s1 + $0x2c] sm:$0xf]
  %v59 = vld [vmem:[%s1 + $0x30] sm:$0xf]
  %v60 = vld [vmem:[%s1 + $0x34] sm:$0xf]
  %v61 = vld [vmem:[%s1 + $0x38] sm:$0xf]
  %v62 = vld [vmem:[%s1 + $0x3c] sm:$0xf]
  %v63 = vld [vmem:[%s1 + $0x40] sm:$0xf]
  %v64 = vld [vmem:[%s1 + $0x44] sm:$0xf]
  %v65 = vld [vmem:[%s1 + $0x48] sm:$0x7]
  %v98 = vunpack.c.l.b16 %v15
  %v99 = vunpack.c.h.b16 %v15
  %v100 = vunpack.c.l.b16 %v16
  %v101 = vunpack.c.h.b16 %v16
  %v102 = vunpack.c.l.b16 %v17
  %v103 = vunpack.c.h.b16 %v17
  %v104 = vunpack.c.l.b16 %v18
  %v105 = vunpack.c.h.b16 %v18
  %v106 = vunpack.c.l.b16 %v19
  %v107 = vunpack.c.h.b16 %v19
  %v108 = vunpack.c.l.b16 %v20
  %v109 = vunpack.c.h.b16 %v20
  %v110 = vunpack.c.l.b16 %v21
  %v111 = vunpack.c.h.b16 %v21
  %v112 = vunpack.c.l.b16 %v22
  %v113 = vunpack.c.h.b16 %v22
  %v114 = vunpack.c.l.b16 %v23
  %v115 = vunpack.c.h.b16 %v23
  %v116 = vunpack.c.l.b16 %v24
  %v117 = vunpack.c.h.b16 %v24
  %v118 = vunpack.c.l.b16 %v25
  %v119 = vunpack.c.h.b16 %v25
  %v120 = vunpack.c.l.b16 %v26
  %v121 = vunpack.c.h.b16 %v26
  %v122 = vunpack.c.l.b16 %v27
  %v123 = vunpack.c.h.b16 %v27
  %v124 = vunpack.c.l.b16 %v28
  %v125 = vunpack.c.h.b16 %v28
  %v126 = vunpack.c.l.b16 %v29
  %v127 = vunpack.c.h.b16 %v29
  %v128 = vunpack.c.l.b16 %v30
  %v129 = vunpack.c.h.b16 %v30
  %v130 = vunpack.c.l.b16 %v31
  %v131 = vunpack.c.h.b16 %v31
  %v132 = vunpack.c.l.b16 %v32
  %v133 = vunpack.c.h.b16 %v32
  %v134 = vunpack.c.l.b16 %v33
  %v135 = vunpack.c.h.b16 %v33
  %v136 = vunpack.c.l.b16 %v34
  %v137 = vunpack.c.h.b16 %v34
  %v138 = vunpack.c.l.b16 %v35
  %v139 = vunpack.c.h.b16 %v35
  %v140 = vunpack.c.l.b16 %v36
  %v141 = vunpack.c.h.b16 %v36
  %v142 = vunpack.c.l.b16 %v37
  %v143 = vunpack.c.h.b16 %v37
  %v144 = vunpack.c.l.b16 %v38
  %v145 = vunpack.c.h.b16 %v38
  %v146 = vunpack.c.l.b16 %v39
  %v147 = vunpack.c.h.b16 %v39
  %v148 = vunpack.c.l.b16 %v40
  %v149 = vunpack.c.h.b16 %v40
  %v150 = vunpack.c.l.b16 %v41
  %v151 = vunpack.c.h.b16 %v41
  %v152 = vunpack.c.l.b16 %v42
  %v153 = vunpack.c.h.b16 %v42
  %v154 = vunpack.c.l.b16 %v43
  %v155 = vunpack.c.h.b16 %v43
  %v156 = vunpack.c.l.b16 %v44
  %v157 = vunpack.c.h.b16 %v44
  %v158 = vunpack.c.l.b16 %v45
  %v159 = vunpack.c.h.b16 %v45
  %v160 = vunpack.c.l.b16 %v46
  %v161 = vunpack.c.h.b16 %v46
  %v162 = vpack.c.b16 %v100, %v98
  %v163 = vpack.c.b16 %v101, %v99
  %v164 = vpack.c.b16 %v104, %v102
  %v165 = vpack.c.b16 %v105, %v103
  %v166 = vpack.c.b16 %v108, %v106
  %v167 = vpack.c.b16 %v109, %v107
  %v168 = vpack.c.b16 %v112, %v110
  %v169 = vpack.c.b16 %v113, %v111
  %v170 = vpack.c.b16 %v116, %v114
  %v171 = vpack.c.b16 %v117, %v115
  %v172 = vpack.c.b16 %v120, %v118
  %v173 = vpack.c.b16 %v121, %v119
  %v174 = vpack.c.b16 %v124, %v122
  %v175 = vpack.c.b16 %v125, %v123
  %v176 = vpack.c.b16 %v128, %v126
  %v177 = vpack.c.b16 %v129, %v127
  %v178 = vpack.c.b16 %v132, %v130
  %v179 = vpack.c.b16 %v133, %v131
  %v180 = vpack.c.b16 %v136, %v134
  %v181 = vpack.c.b16 %v137, %v135
  %v182 = vpack.c.b16 %v140, %v138
  %v183 = vpack.c.b16 %v141, %v139
  %v184 = vpack.c.b16 %v144, %v142
  %v185 = vpack.c.b16 %v145, %v143
  %v186 = vpack.c.b16 %v148, %v146
  %v187 = vpack.c.b16 %v149, %v147
  %v188 = vpack.c.b16 %v152, %v150
  %v189 = vpack.c.b16 %v153, %v151
  %v190 = vpack.c.b16 %v156, %v154
  %v191 = vpack.c.b16 %v157, %v155
  %v192 = vpack.c.b16 %v160, %v158
  %v193 = vpack.c.b16 %v161, %v159
  %v229 = vunpack.c.l.b16 %v47
  %v230 = vunpack.c.l.b16 %v48
  %v231 = vunpack.c.l.b16 %v49
  %v232 = vunpack.c.l.b16 %v50
  %v233 = vunpack.c.l.b16 %v51
  %v234 = vunpack.c.l.b16 %v52
  %v235 = vunpack.c.l.b16 %v53
  %v236 = vunpack.c.l.b16 %v54
  %v237 = vunpack.c.l.b16 %v55
  %v238 = vunpack.c.l.b16 %v56
  %v239 = vunpack.c.l.b16 %v57
  %v240 = vunpack.c.l.b16 %v58
  %v241 = vunpack.c.l.b16 %v59
  %v242 = vunpack.c.l.b16 %v60
  %v243 = vunpack.c.l.b16 %v61
  %v244 = vunpack.c.l.b16 %v62
  %v245 = vunpack.c.l.b16 %v63
  %v246 = vunpack.c.l.b16 %v64
  %v247 = vunpack.c.l.b16 %v65
  %v248 = vpack.c.b16 %v230, %v229
  %v249 = vpack.c.b16 %v232, %v231
  %v250 = vpack.c.b16 %v234, %v233
  %v251 = vpack.c.b16 %v236, %v235
  %v252 = vpack.c.b16 %v238, %v237
  %v253 = vpack.c.b16 %v240, %v239
  %v254 = vpack.c.b16 %v242, %v241
  %v255 = vpack.c.b16 %v244, %v243
  %v256 = vpack.c.b16 %v246, %v245
  %v257 = vpack.c.b16 %v247, %v247
  %vm267 = vcmask 179200
  %v269 = vsel %vm267, %v163, 0
  %v272 = vsel %vm267, %v165, 0
  %v275 = vsel %vm267, %v167, 0
  %v278 = vsel %vm267, %v169, 0
  %v281 = vsel %vm267, %v171, 0
  %v284 = vsel %vm267, %v173, 0
  %v287 = vsel %vm267, %v175, 0
  %v290 = vsel %vm267, %v177, 0
  %v293 = vsel %vm267, %v179, 0
  %v296 = vsel %vm267, %v181, 0
  %v299 = vsel %vm267, %v183, 0
  %v302 = vsel %vm267, %v185, 0
  %v305 = vsel %vm267, %v187, 0
  %v308 = vsel %vm267, %v189, 0
  %v311 = vsel %vm267, %v191, 0
  %v314 = vsel %vm267, %v193, 0
  %vm316 = vcmask 1042432
  %v318 = vsel %vm316, %v257, 0
  %320 = vmatpush.bf16.msra.mxu0 %v255
  %321 = vmatpush.bf16.msra.mxu0 %v254
  %322 = vmatpush.bf16.msra.mxu0 %v253
  %323 = vmatpush.bf16.msra.mxu0 %v252
  %324 = vmatpush.bf16.msra.mxu0 %v251
  %325 = vmatpush.bf16.msra.mxu0 %v250
  %326 = vmatpush.bf16.msra.mxu0 %v249
  %327 = vmatpush.bf16.msra.mxu0 %v248
  %328 = vmatmul.bf16.gmra.mxu0 %v162
  %v329 = vpop.f32.mrf.mxu0
  %v330 = vadd.f32 0.0, %v329
  %v331 = vpop.f32.mrf.mxu0
  %v332 = vadd.f32 0.0, %v331
  %333 = vmatmul.bf16.gmra.mxu0 %v164
  %v334 = vpop.f32.mrf.mxu0
  %v335 = vadd.f32 0.0, %v334
  %v336 = vpop.f32.mrf.mxu0
  %v337 = vadd.f32 0.0, %v336
  %338 = vmatmul.bf16.gmra.mxu0 %v166
  %v339 = vpop.f32.mrf.mxu0
  %v340 = vadd.f32 0.0, %v339
  %v341 = vpop.f32.mrf.mxu0
  %v342 = vadd.f32 0.0, %v341
  %343 = vmatmul.bf16.gmra.mxu0 %v168
  %v344 = vpop.f32.mrf.mxu0
  %v345 = vadd.f32 0.0, %v344
  %v346 = vpop.f32.mrf.mxu0
  %v347 = vadd.f32 0.0, %v346
  %348 = vmatmul.bf16.gmra.mxu0 %v170
  %v349 = vpop.f32.mrf.mxu0
  %v350 = vadd.f32 0.0, %v349
  %v351 = vpop.f32.mrf.mxu0
  %v352 = vadd.f32 0.0, %v351
  %353 = vmatmul.bf16.gmra.mxu0 %v172
  %v354 = vpop.f32.mrf.mxu0
  %v355 = vadd.f32 0.0, %v354
  %v356 = vpop.f32.mrf.mxu0
  %v357 = vadd.f32 0.0, %v356
  %358 = vmatmul.bf16.gmra.mxu0 %v174
  %v359 = vpop.f32.mrf.mxu0
  %v360 = vadd.f32 0.0, %v359
  %v361 = vpop.f32.mrf.mxu0
  %v362 = vadd.f32 0.0, %v361
  %363 = vmatmul.bf16.gmra.mxu0 %v176
  %v364 = vpop.f32.mrf.mxu0
  %v365 = vadd.f32 0.0, %v364
  %v366 = vpop.f32.mrf.mxu0
  %v367 = vadd.f32 0.0, %v366
  %368 = vmatmul.bf16.gmra.mxu0 %v178
  %v369 = vpop.f32.mrf.mxu0
  %v370 = vadd.f32 0.0, %v369
  %v371 = vpop.f32.mrf.mxu0
  %v372 = vadd.f32 0.0, %v371
  %373 = vmatmul.bf16.gmra.mxu0 %v180
  %v374 = vpop.f32.mrf.mxu0
  %v375 = vadd.f32 0.0, %v374
  %v376 = vpop.f32.mrf.mxu0
  %v377 = vadd.f32 0.0, %v376
  %378 = vmatmul.bf16.gmra.mxu0 %v182
  %v379 = vpop.f32.mrf.mxu0
  %v380 = vadd.f32 0.0, %v379
  %v381 = vpop.f32.mrf.mxu0
  %v382 = vadd.f32 0.0, %v381
  %383 = vmatmul.bf16.gmra.mxu0 %v184
  %v384 = vpop.f32.mrf.mxu0
  %v385 = vadd.f32 0.0, %v384
  %v386 = vpop.f32.mrf.mxu0
  %v387 = vadd.f32 0.0, %v386
  %388 = vmatmul.bf16.gmra.mxu0 %v186
  %v389 = vpop.f32.mrf.mxu0
  %v390 = vadd.f32 0.0, %v389
  %v391 = vpop.f32.mrf.mxu0
  %v392 = vadd.f32 0.0, %v391
  %393 = vmatmul.bf16.gmra.mxu0 %v188
  %v394 = vpop.f32.mrf.mxu0
  %v395 = vadd.f32 0.0, %v394
  %v396 = vpop.f32.mrf.mxu0
  %v397 = vadd.f32 0.0, %v396
  %398 = vmatmul.bf16.gmra.mxu0 %v190
  %v399 = vpop.f32.mrf.mxu0
  %v400 = vadd.f32 0.0, %v399
  %v401 = vpop.f32.mrf.mxu0
  %v402 = vadd.f32 0.0, %v401
  %403 = vmatmul.bf16.gmra.mxu0 %v192
  %v404 = vpop.f32.mrf.mxu0
  %v405 = vadd.f32 0.0, %v404
  %v406 = vpop.f32.mrf.mxu0
  %v407 = vadd.f32 0.0, %v406
  %408 = vdwg.mxu0
  %409 = vmatpush.bf16.msra.mxu0 0
  %410 = vmatpush.bf16.msra.mxu0 0
  %411 = vmatpush.bf16.msra.mxu0 0
  %412 = vmatpush.bf16.msra.mxu0 0
  %413 = vmatpush.bf16.msra.mxu0 0
  %414 = vmatpush.bf16.msra.mxu0 0
  %415 = vmatpush.bf16.msra.mxu0 %v318
  %416 = vmatpush.bf16.msra.mxu0 %v256
  %417 = vmatmul.bf16.gmra.mxu0 %v269
  %v418 = vpop.f32.mrf.mxu0
  %v419 = vadd.f32 %v330, %v418
  %v420 = vpop.f32.mrf.mxu0
  %v421 = vadd.f32 %v332, %v420
  %422 = vmatmul.bf16.gmra.mxu0 %v272
  %v423 = vpop.f32.mrf.mxu0
  %v424 = vadd.f32 %v335, %v423
  %v425 = vpop.f32.mrf.mxu0
  %v426 = vadd.f32 %v337, %v425
  %427 = vmatmul.bf16.gmra.mxu0 %v275
  %v428 = vpop.f32.mrf.mxu0
  %v429 = vadd.f32 %v340, %v428
  %v430 = vpop.f32.mrf.mxu0
  %v431 = vadd.f32 %v342, %v430
  %432 = vmatmul.bf16.gmra.mxu0 %v278
  %v433 = vpop.f32.mrf.mxu0
  %v434 = vadd.f32 %v345, %v433
  %v435 = vpop.f32.mrf.mxu0
  %v436 = vadd.f32 %v347, %v435
  %437 = vmatmul.bf16.gmra.mxu0 %v281
  %v438 = vpop.f32.mrf.mxu0
  %v439 = vadd.f32 %v350, %v438
  %v440 = vpop.f32.mrf.mxu0
  %v441 = vadd.f32 %v352, %v440
  %442 = vmatmul.bf16.gmra.mxu0 %v284
  %v443 = vpop.f32.mrf.mxu0
  %v444 = vadd.f32 %v355, %v443
  %v445 = vpop.f32.mrf.mxu0
  %v446 = vadd.f32 %v357, %v445
  %447 = vmatmul.bf16.gmra.mxu0 %v287
  %v448 = vpop.f32.mrf.mxu0
  %v449 = vadd.f32 %v360, %v448
  %v450 = vpop.f32.mrf.mxu0
  %v451 = vadd.f32 %v362, %v450
  %452 = vmatmul.bf16.gmra.mxu0 %v290
  %v453 = vpop.f32.mrf.mxu0
  %v454 = vadd.f32 %v365, %v453
  %v455 = vpop.f32.mrf.mxu0
  %v456 = vadd.f32 %v367, %v455
  %457 = vmatmul.bf16.gmra.mxu0 %v293
  %v458 = vpop.f32.mrf.mxu0
  %v459 = vadd.f32 %v370, %v458
  %v460 = vpop.f32.mrf.mxu0
  %v461 = vadd.f32 %v372, %v460
  %462 = vmatmul.bf16.gmra.mxu0 %v296
  %v463 = vpop.f32.mrf.mxu0
  %v464 = vadd.f32 %v375, %v463
  %v465 = vpop.f32.mrf.mxu0
  %v466 = vadd.f32 %v377, %v465
  %467 = vmatmul.bf16.gmra.mxu0 %v299
  %v468 = vpop.f32.mrf.mxu0
  %v469 = vadd.f32 %v380, %v468
  %v470 = vpop.f32.mrf.mxu0
  %v471 = vadd.f32 %v382, %v470
  %472 = vmatmul.bf16.gmra.mxu0 %v302
  %v473 = vpop.f32.mrf.mxu0
  %v474 = vadd.f32 %v385, %v473
  %v475 = vpop.f32.mrf.mxu0
  %v476 = vadd.f32 %v387, %v475
  %477 = vmatmul.bf16.gmra.mxu0 %v305
  %v478 = vpop.f32.mrf.mxu0
  %v479 = vadd.f32 %v390, %v478
  %v480 = vpop.f32.mrf.mxu0
  %v481 = vadd.f32 %v392, %v480
  %482 = vmatmul.bf16.gmra.mxu0 %v308
  %v483 = vpop.f32.mrf.mxu0
  %v484 = vadd.f32 %v395, %v483
  %v485 = vpop.f32.mrf.mxu0
  %v486 = vadd.f32 %v397, %v485
  %487 = vmatmul.bf16.gmra.mxu0 %v311
  %v488 = vpop.f32.mrf.mxu0
  %v489 = vadd.f32 %v400, %v488
  %v490 = vpop.f32.mrf.mxu0
  %v491 = vadd.f32 %v402, %v490
  %492 = vmatmul.bf16.gmra.mxu0 %v314
  %v493 = vpop.f32.mrf.mxu0
  %v494 = vadd.f32 %v405, %v493
  %v495 = vpop.f32.mrf.mxu0
  %v496 = vadd.f32 %v407, %v495
  %497 = vdwg.mxu0
  %v498 = vmax.f32 %v419, %v439
  %v499 = vmax.f32 %v421, %v441
  %v500 = vmax.f32 %v424, %v444
  %v501 = vmax.f32 %v426, %v446
  %v502 = vmax.f32 %v429, %v449
  %v503 = vmax.f32 %v431, %v451
  %v504 = vmax.f32 %v434, %v454
  %v505 = vmax.f32 %v436, %v456
  %v506 = vmax.f32 %v459, %v479
  %v507 = vmax.f32 %v461, %v481
  %v508 = vmax.f32 %v464, %v484
  %v509 = vmax.f32 %v466, %v486
  %v510 = vmax.f32 %v469, %v489
  %v511 = vmax.f32 %v471, %v491
  %v512 = vmax.f32 %v474, %v494
  %v513 = vmax.f32 %v476, %v496
  %v514 = vmax.f32 %v498, %v506
  %v515 = vmax.f32 %v499, %v507
  %v516 = vmax.f32 %v500, %v508
  %v517 = vmax.f32 %v501, %v509
  %v518 = vmax.f32 %v502, %v510
  %v519 = vmax.f32 %v503, %v511
  %v520 = vmax.f32 %v504, %v512
  %v521 = vmax.f32 %v505, %v513
  %v522 = vld [vmem:[%s2] sm:$0x1]
  %v524 = vperm.slane %v522, 0
  %v526 = vadd.f32 %v514, %v524
  %v527 = vadd.f32 %v515, %v524
  %v528 = vadd.f32 %v516, %v524
  %v529 = vadd.f32 %v517, %v524
  %v530 = vadd.f32 %v518, %v524
  %v531 = vadd.f32 %v519, %v524
  %v532 = vadd.f32 %v520, %v524
  %v533 = vadd.f32 %v521, %v524
  %v534 = vmax.f32 %v526, 0.0
  %v535 = vmax.f32 %v527, 0.0
  %v536 = vmax.f32 %v528, 0.0
  %v537 = vmax.f32 %v529, 0.0
  %v538 = vmax.f32 %v530, 0.0
  %v539 = vmax.f32 %v531, 0.0
  %v540 = vmax.f32 %v532, 0.0
  %v541 = vmax.f32 %v533, 0.0
  %v542 = vpack.c.bf16 %v534, %v534
  %v543 = vpack.c.bf16 %v535, %v535
  %v544 = vpack.c.bf16 %v536, %v536
  %v545 = vpack.c.bf16 %v537, %v537
  %v546 = vpack.c.bf16 %v538, %v538
  %v547 = vpack.c.bf16 %v539, %v539
  %v548 = vpack.c.bf16 %v540, %v540
  %v549 = vpack.c.bf16 %v541, %v541
  %550 = vst [vmem:[%s3] sm:$0xf] %v542
  %551 = vst [vmem:[%s3 + $0x4] sm:$0xf] %v543
  %552 = vst [vmem:[%s3 + $0x8] sm:$0xf] %v544
  %553 = vst [vmem:[%s3 + $0xc] sm:$0xf] %v545
  %554 = vst [vmem:[%s3 + $0x10] sm:$0xf] %v546
  %555 = vst [vmem:[%s3 + $0x14] sm:$0xf] %v547
  %556 = vst [vmem:[%s3 + $0x18] sm:$0xf] %v548
  %557 = vst [vmem:[%s3 + $0x1c] sm:$0xf] %v549
  // Predicated region
  $region14: #{lenet5_forward.4} parent=0 // pred_check
    _
  $region15: #{lenet5_forward.4} parent=0 // pred_check_branch
    %559 = sbr.rel (0) target = $region17
  $region16: #{lenet5_forward.4} parent=0 // pred_region
    _
  $region17: #{lenet5_forward.4} parent=0 // pred_fallthru
    _
  // Predicated region
  $region18: #{lenet5_forward.4} parent=0 // pred_check
    _
  $region19: #{lenet5_forward.4} parent=0 // pred_check_branch
    %561 = sbr.rel (0) target = $region21
  $region20: #{lenet5_forward.4} parent=0 // pred_region
    _
  $region21: #{lenet5_forward.4} parent=0 // pred_fallthru
    _

// kernel: lenet5_forward.5
$region0: #{lenet5_forward.5}
  #allocation0 [shape = 'u32[]', space=smem, size = 0x4, offset = 0x4, fixed_abs, tag = 'smem constant byte address 0x4 - core index']
  #allocation1 [shape = 'u32[72,128]{1,0:T(1,128)}', space=vmem, size = 0x9000, scoped, tag = 'internal scratch']
  %s0 = inlined_call_operand.vmem [shape: bf16[8,400], index: 0, kind: input, shape index: {}]
  %s1 = inlined_call_operand.vmem [shape: bf16[400,120], index: 1, kind: input, shape index: {}]
  %s2 = inlined_call_operand.vmem [shape: f32[1,120], index: 2, kind: input, shape index: {}]
  %s3 = inlined_call_operand.vmem [shape: bf16[120,84], index: 3, kind: input, shape index: {}]
  %s4 = inlined_call_operand.vmem [shape: f32[1,84], index: 4, kind: input, shape index: {}]
  %s5 = inlined_call_operand.vmem [shape: bf16[84,10], index: 5, kind: input, shape index: {}]
  %s6 = inlined_call_operand.vmem [shape: f32[1,10], index: 6, kind: input, shape index: {}]
  %s7 = inlined_call_operand.vmem [shape: f32[8,10], index: 7, kind: output, shape index: {}]
  %s8 = sld [smem:[#allocation0]]
  $region38: #{lenet5_forward.5} parent=0
    _
  %s10 = ssub.s32 1, %s8
  %s11 = scalar_select 0, %s10, %s8
  // Predicated region
  $region2: #{lenet5_forward.5} parent=0 // pred_check
    _
  $region3: #{lenet5_forward.5} parent=0 // pred_check_branch
    %13 = sbr.rel (0) target = $region5
  $region4: #{lenet5_forward.5} parent=0 // pred_region
    _
  $region5: #{lenet5_forward.5} parent=0 // pred_fallthru
    _
  // Predicated region
  $region6: #{lenet5_forward.5} parent=0 // pred_check
    _
  $region7: #{lenet5_forward.5} parent=0 // pred_check_branch
    %15 = sbr.rel (0) target = $region9
  $region8: #{lenet5_forward.5} parent=0 // pred_region
    _
  $region9: #{lenet5_forward.5} parent=0 // pred_fallthru
    _
  // Predicated region
  $region10: #{lenet5_forward.5} parent=0 // pred_check
    _
  $region11: #{lenet5_forward.5} parent=0 // pred_check_branch
    %17 = sbr.rel (0) target = $region13
  $region12: #{lenet5_forward.5} parent=0 // pred_region
    _
  $region13: #{lenet5_forward.5} parent=0 // pred_fallthru
    _
  // Predicated region
  $region14: #{lenet5_forward.5} parent=0 // pred_check
    _
  $region15: #{lenet5_forward.5} parent=0 // pred_check_branch
    %19 = sbr.rel (0) target = $region17
  $region16: #{lenet5_forward.5} parent=0 // pred_region
    _
  $region17: #{lenet5_forward.5} parent=0 // pred_fallthru
    _
  // Predicated region
  $region18: #{lenet5_forward.5} parent=0 // pred_check
    _
  $region19: #{lenet5_forward.5} parent=0 // pred_check_branch
    %21 = sbr.rel (0) target = $region21
  $region20: #{lenet5_forward.5} parent=0 // pred_region
    _
  $region21: #{lenet5_forward.5} parent=0 // pred_fallthru
    _
  // Predicated region
  $region22: #{lenet5_forward.5} parent=0 // pred_check
    _
  $region23: #{lenet5_forward.5} parent=0 // pred_check_branch
    %23 = sbr.rel (0) target = $region25
  $region24: #{lenet5_forward.5} parent=0 // pred_region
    _
  $region25: #{lenet5_forward.5} parent=0 // pred_fallthru
    _
  // Predicated region
  $region26: #{lenet5_forward.5} parent=0 // pred_check
    _
  $region27: #{lenet5_forward.5} parent=0 // pred_check_branch
    %25 = sbr.rel (0) target = $region29
  $region28: #{lenet5_forward.5} parent=0 // pred_region
    _
  $region29: #{lenet5_forward.5} parent=0 // pred_fallthru
    _
  %v27 = vld [vmem:[%s0] sm:$0xff]
  %v28 = vld [vmem:[%s0 + $0x8] sm:$0xff]
  %v29 = vld [vmem:[%s1] sm:$0xf]
  %v30 = vld [vmem:[%s1 + $0x4] sm:$0xf]
  %v31 = vld [vmem:[%s1 + $0x8] sm:$0xf]
  %v32 = vld [vmem:[%s1 + $0xc] sm:$0xf]
  %v33 = vld [vmem:[%s1 + $0x10] sm:$0xf]
  %v34 = vld [vmem:[%s1 + $0x14] sm:$0xf]
  %v35 = vld [vmem:[%s1 + $0x18] sm:$0xf]
  %v36 = vld [vmem:[%s1 + $0x1c] sm:$0xf]
  %v37 = vld [vmem:[%s1 + $0x20] sm:$0xf]
  %v38 = vld [vmem:[%s1 + $0x24] sm:$0xf]
  %v39 = vld [vmem:[%s1 + $0x28] sm:$0xf]
  %v40 = vld [vmem:[%s1 + $0x2c] sm:$0xf]
  %v41 = vld [vmem:[%s1 + $0x30] sm:$0xf]
  %v42 = vld [vmem:[%s1 + $0x34] sm:$0xf]
  %v43 = vld [vmem:[%s1 + $0x38] sm:$0xf]
  %v44 = vld [vmem:[%s1 + $0x3c] sm:$0xf]
  %v45 = vld [vmem:[%s1 + $0x40] sm:$0xf]
  %v46 = vld [vmem:[%s1 + $0x44] sm:$0xf]
  %v47 = vld [vmem:[%s1 + $0x48] sm:$0xf]
  %v48 = vld [vmem:[%s1 + $0x4c] sm:$0xf]
  %v49 = vld [vmem:[%s1 + $0x50] sm:$0xf]
  %v50 = vld [vmem:[%s1 + $0x54] sm:$0xf]
  %v51 = vld [vmem:[%s1 + $0x58] sm:$0xf]
  %v52 = vld [vmem:[%s1 + $0x5c] sm:$0xf]
  %v53 = vld [vmem:[%s1 + $0x60] sm:$0xf]
  %v54 = vld [vmem:[%s1 + $0x64] sm:$0xf]
  %v55 = vld [vmem:[%s1 + $0x68] sm:$0xf]
  %v56 = vld [vmem:[%s1 + $0x6c] sm:$0xf]
  %v57 = vld [vmem:[%s1 + $0x70] sm:$0xf]
  %v58 = vld [vmem:[%s1 + $0x74] sm:$0xf]
  %v59 = vld [vmem:[%s1 + $0x78] sm:$0xf]
  %v60 = vld [vmem:[%s1 + $0x7c] sm:$0xf]
  %v61 = vld [vmem:[%s1 + $0x80] sm:$0xf]
  %v62 = vld [vmem:[%s1 + $0x84] sm:$0xf]
  %v63 = vld [vmem:[%s1 + $0x88] sm:$0xf]
  %v64 = vld [vmem:[%s1 + $0x8c] sm:$0xf]
  %v65 = vld [vmem:[%s1 + $0x90] sm:$0xf]
  %v66 = vld [vmem:[%s1 + $0x94] sm:$0xf]
  %v67 = vld [vmem:[%s1 + $0x98] sm:$0xf]
  %v68 = vld [vmem:[%s1 + $0x9c] sm:$0xf]
  %v69 = vld [vmem:[%s1 + $0xa0] sm:$0xf]
  %v70 = vld [vmem:[%s1 + $0xa4] sm:$0xf]
  %v71 = vld [vmem:[%s1 + $0xa8] sm:$0xf]
  %v72 = vld [vmem:[%s1 + $0xac] sm:$0xf]
  %v73 = vld [vmem:[%s1 + $0xb0] sm:$0xf]
  %v74 = vld [vmem:[%s1 + $0xb4] sm:$0xf]
  %v75 = vld [vmem:[%s1 + $0xb8] sm:$0xf]
  %v76 = vld [vmem:[%s1 + $0xbc] sm:$0xf]
  %v77 = vld [vmem:[%s1 + $0xc0] sm:$0xf]
  %v78 = vld [vmem:[%s1 + $0xc4] sm:$0xf]
  %v79 = vld [vmem:[%s2] sm:$0x1]
  %v81 = vperm.slane %v79, 0
  %v85 = vunpack.c.l.b16 %v27
  %v86 = vunpack.c.h.b16 %v27
  %v87 = vunpack.c.l.b16 %v28
  %v88 = vunpack.c.h.b16 %v28
  %v89 = vpack.c.b16 %v85, %v85
  %v90 = vpack.c.b16 %v86, %v86
  %v91 = vpack.c.b16 %v87, %v87
  %v92 = vpack.c.b16 %v88, %v88
  %v146 = vunpack.c.l.b16 %v29
  %v147 = vunpack.c.l.b16 %v30
  %v148 = vunpack.c.l.b16 %v31
  %v149 = vunpack.c.l.b16 %v32
  %v150 = vunpack.c.l.b16 %v33
  %v151 = vunpack.c.l.b16 %v34
  %v152 = vunpack.c.l.b16 %v35
  %v153 = vunpack.c.l.b16 %v36
  %v154 = vunpack.c.l.b16 %v37
  %v155 = vunpack.c.l.b16 %v38
  %v156 = vunpack.c.l.b16 %v39
  %v157 = vunpack.c.l.b16 %v40
  %v158 = vunpack.c.l.b16 %v41
  %v159 = vunpack.c.l.b16 %v42
  %v160 = vunpack.c.l.b16 %v43
  %v161 = vunpack.c.l.b16 %v44
  %v162 = vunpack.c.l.b16 %v45
  %v163 = vunpack.c.l.b16 %v46
  %v164 = vunpack.c.l.b16 %v47
  %v165 = vunpack.c.l.b16 %v48
  %v166 = vunpack.c.l.b16 %v49
  %v167 = vunpack.c.l.b16 %v50
  %v168 = vunpack.c.l.b16 %v51
  %v169 = vunpack.c.l.b16 %v52
  %v170 = vunpack.c.l.b16 %v53
  %v171 = vunpack.c.l.b16 %v54
  %v172 = vunpack.c.l.b16 %v55
  %v173 = vunpack.c.l.b16 %v56
  %v174 = vunpack.c.l.b16 %v57
  %v175 = vunpack.c.l.b16 %v58
  %v176 = vunpack.c.l.b16 %v59
  %v177 = vunpack.c.l.b16 %v60
  %v178 = vunpack.c.l.b16 %v61
  %v179 = vunpack.c.l.b16 %v62
  %v180 = vunpack.c.l.b16 %v63
  %v181 = vunpack.c.l.b16 %v64
  %v182 = vunpack.c.l.b16 %v65
  %v183 = vunpack.c.l.b16 %v66
  %v184 = vunpack.c.l.b16 %v67
  %v185 = vunpack.c.l.b16 %v68
  %v186 = vunpack.c.l.b16 %v69
  %v187 = vunpack.c.l.b16 %v70
  %v188 = vunpack.c.l.b16 %v71
  %v189 = vunpack.c.l.b16 %v72
  %v190 = vunpack.c.l.b16 %v73
  %v191 = vunpack.c.l.b16 %v74
  %v192 = vunpack.c.l.b16 %v75
  %v193 = vunpack.c.l.b16 %v76
  %v194 = vunpack.c.l.b16 %v77
  %v195 = vunpack.c.l.b16 %v78
  %v196 = vpack.c.b16 %v147, %v146
  %v197 = vpack.c.b16 %v149, %v148
  %v198 = vpack.c.b16 %v151, %v150
  %v199 = vpack.c.b16 %v153, %v152
  %v200 = vpack.c.b16 %v155, %v154
  %v201 = vpack.c.b16 %v157, %v156
  %v202 = vpack.c.b16 %v159, %v158
  %v203 = vpack.c.b16 %v161, %v160
  %v204 = vpack.c.b16 %v163, %v162
  %v205 = vpack.c.b16 %v165, %v164
  %v206 = vpack.c.b16 %v167, %v166
  %v207 = vpack.c.b16 %v169, %v168
  %v208 = vpack.c.b16 %v171, %v170
  %v209 = vpack.c.b16 %v173, %v172
  %v210 = vpack.c.b16 %v175, %v174
  %v211 = vpack.c.b16 %v177, %v176
  %v212 = vpack.c.b16 %v179, %v178
  %v213 = vpack.c.b16 %v181, %v180
  %v214 = vpack.c.b16 %v183, %v182
  %v215 = vpack.c.b16 %v185, %v184
  %v216 = vpack.c.b16 %v187, %v186
  %v217 = vpack.c.b16 %v189, %v188
  %v218 = vpack.c.b16 %v191, %v190
  %v219 = vpack.c.b16 %v193, %v192
  %v220 = vpack.c.b16 %v195, %v194
  %vm246 = vcmask 130048
  %v248 = vsel %vm246, %v92, 0
  %250 = vmatpush.bf16.msra.mxu0 %v203
  %251 = vmatpush.bf16.msra.mxu0 %v202
  %252 = vmatpush.bf16.msra.mxu0 %v201
  %253 = vmatpush.bf16.msra.mxu0 %v200
  %254 = vmatpush.bf16.msra.mxu0 %v199
  %255 = vmatpush.bf16.msra.mxu0 %v198
  %256 = vmatpush.bf16.msra.mxu0 %v197
  %257 = vmatpush.bf16.msra.mxu0 %v196
  %258 = vmatmul.bf16.gmra.mxu0 %v89
  %v259 = vpop.f32.mrf.mxu0
  %v260 = vadd.f32 %v81, %v259
  %v261 = vpop.f32.mrf.mxu0
  %262 = vdwg.mxu0
  %263 = vmatpush.bf16.msra.mxu0 %v211
  %264 = vmatpush.bf16.msra.mxu0 %v210
  %265 = vmatpush.bf16.msra.mxu0 %v209
  %266 = vmatpush.bf16.msra.mxu0 %v208
  %267 = vmatpush.bf16.msra.mxu0 %v207
  %268 = vmatpush.bf16.msra.mxu0 %v206
  %269 = vmatpush.bf16.msra.mxu0 %v205
  %270 = vmatpush.bf16.msra.mxu0 %v204
  %271 = vmatmul.bf16.gmra.mxu0 %v90
  %v272 = vpop.f32.mrf.mxu0
  %v273 = vadd.f32 %v260, %v272
  %v274 = vpop.f32.mrf.mxu0
  %275 = vdwg.mxu0
  %276 = vmatpush.bf16.msra.mxu0 %v219
  %277 = vmatpush.bf16.msra.mxu0 %v218
  %278 = vmatpush.bf16.msra.mxu0 %v217
  %279 = vmatpush.bf16.msra.mxu0 %v216
  %280 = vmatpush.bf16.msra.mxu0 %v215
  %281 = vmatpush.bf16.msra.mxu0 %v214
  %282 = vmatpush.bf16.msra.mxu0 %v213
  %283 = vmatpush.bf16.msra.mxu0 %v212
  %284 = vmatmul.bf16.gmra.mxu0 %v91
  %v285 = vpop.f32.mrf.mxu0
  %v286 = vadd.f32 %v273, %v285
  %v287 = vpop.f32.mrf.mxu0
  %288 = vdwg.mxu0
  %289 = vmatpush.bf16.msra.mxu0 0
  %290 = vmatpush.bf16.msra.mxu0 0
  %291 = vmatpush.bf16.msra.mxu0 0
  %292 = vmatpush.bf16.msra.mxu0 0
  %293 = vmatpush.bf16.msra.mxu0 0
  %294 = vmatpush.bf16.msra.mxu0 0
  %295 = vmatpush.bf16.msra.mxu0 0
  %296 = vmatpush.bf16.msra.mxu0 %v220
  %297 = vmatmul.bf16.gmra.mxu0 %v248
  %v298 = vpop.f32.mrf.mxu0
  %v299 = vadd.f32 %v286, %v298
  %v300 = vpop.f32.mrf.mxu0
  %301 = vdwg.mxu0
  %v302 = vmax.f32 %v299, 0.0
  %v303 = vpack.c.bf16 %v302, %v302
  %v304 = vld [vmem:[%s3] sm:$0xf]
  %v305 = vld [vmem:[%s3 + $0x4] sm:$0xf]
  %v306 = vld [vmem:[%s3 + $0x8] sm:$0xf]
  %v307 = vld [vmem:[%s3 + $0xc] sm:$0xf]
  %v308 = vld [vmem:[%s3 + $0x10] sm:$0xf]
  %v309 = vld [vmem:[%s3 + $0x14] sm:$0xf]
  %v310 = vld [vmem:[%s3 + $0x18] sm:$0xf]
  %v311 = vld [vmem:[%s3 + $0x1c] sm:$0xf]
  %v312 = vld [vmem:[%s3 + $0x20] sm:$0xf]
  %v313 = vld [vmem:[%s3 + $0x24] sm:$0xf]
  %v314 = vld [vmem:[%s3 + $0x28] sm:$0xf]
  %v315 = vld [vmem:[%s3 + $0x2c] sm:$0xf]
  %v316 = vld [vmem:[%s3 + $0x30] sm:$0xf]
  %v317 = vld [vmem:[%s3 + $0x34] sm:$0xf]
  %v318 = vld [vmem:[%s3 + $0x38] sm:$0xf]
  %v319 = vld [vmem:[%s4] sm:$0x1]
  %v321 = vperm.slane %v319, 0
  %v338 = vunpack.c.l.b16 %v304
  %v339 = vunpack.c.l.b16 %v305
  %v340 = vunpack.c.l.b16 %v306
  %v341 = vunpack.c.l.b16 %v307
  %v342 = vunpack.c.l.b16 %v308
  %v343 = vunpack.c.l.b16 %v309
  %v344 = vunpack.c.l.b16 %v310
  %v345 = vunpack.c.l.b16 %v311
  %v346 = vunpack.c.l.b16 %v312
  %v347 = vunpack.c.l.b16 %v313
  %v348 = vunpack.c.l.b16 %v314
  %v349 = vunpack.c.l.b16 %v315
  %v350 = vunpack.c.l.b16 %v316
  %v351 = vunpack.c.l.b16 %v317
  %v352 = vunpack.c.l.b16 %v318
  %v353 = vpack.c.b16 %v339, %v338
  %v354 = vpack.c.b16 %v341, %v340
  %v355 = vpack.c.b16 %v343, %v342
  %v356 = vpack.c.b16 %v345, %v344
  %v357 = vpack.c.b16 %v347, %v346
  %v358 = vpack.c.b16 %v349, %v348
  %v359 = vpack.c.b16 %v351, %v350
  %v360 = vpack.c.b16 %v352, %v352
  %vm368 = vcmask 982016
  %v370 = vsel %vm368, %v303, 0
  %vm372 = vcmask 1043456
  %v374 = vsel %vm372, %v360, 0
  %376 = vmatpush.bf16.msra.mxu0 %v374
  %377 = vmatpush.bf16.msra.mxu0 %v359
  %378 = vmatpush.bf16.msra.mxu0 %v358
  %379 = vmatpush.bf16.msra.mxu0 %v357
  %380 = vmatpush.bf16.msra.mxu0 %v356
  %381 = vmatpush.bf16.msra.mxu0 %v355
  %382 = vmatpush.bf16.msra.mxu0 %v354
  %383 = vmatpush.bf16.msra.mxu0 %v353
  %384 = vmatmul.bf16.gmra.mxu0 %v370
  %v385 = vpop.f32.mrf.mxu0
  %v386 = vadd.f32 %v321, %v385
  %v387 = vpop.f32.mrf.mxu0
  %388 = vdwg.mxu0
  %v389 = vmax.f32 %v386, 0.0
  %v390 = vpack.c.bf16 %v389, %v389
  %v391 = vld [vmem:[%s5] sm:$0xf]
  %v392 = vld [vmem:[%s5 + $0x4] sm:$0xf]
  %v393 = vld [vmem:[%s5 + $0x8] sm:$0xf]
  %v394 = vld [vmem:[%s5 + $0xc] sm:$0xf]
  %v395 = vld [vmem:[%s5 + $0x10] sm:$0xf]
  %v396 = vld [vmem:[%s5 + $0x14] sm:$0xf]
  %v397 = vld [vmem:[%s5 + $0x18] sm:$0xf]
  %v398 = vld [vmem:[%s5 + $0x1c] sm:$0xf]
  %v399 = vld [vmem:[%s5 + $0x20] sm:$0xf]
  %v400 = vld [vmem:[%s5 + $0x24] sm:$0xf]
  %v401 = vld [vmem:[%s5 + $0x28] sm:$0x3]
  %v402 = vld [vmem:[%s6] sm:$0x1]
  %v404 = vperm.slane %v402, 0
  %v417 = vunpack.c.l.b16 %v391
  %v418 = vunpack.c.l.b16 %v392
  %v419 = vunpack.c.l.b16 %v393
  %v420 = vunpack.c.l.b16 %v394
  %v421 = vunpack.c.l.b16 %v395
  %v422 = vunpack.c.l.b16 %v396
  %v423 = vunpack.c.l.b16 %v397
  %v424 = vunpack.c.l.b16 %v398
  %v425 = vunpack.c.l.b16 %v399
  %v426 = vunpack.c.l.b16 %v400
  %v427 = vunpack.c.l.b16 %v401
  %v428 = vpack.c.b16 %v418, %v417
  %v429 = vpack.c.b16 %v420, %v419
  %v430 = vpack.c.b16 %v422, %v421
  %v431 = vpack.c.b16 %v424, %v423
  %v432 = vpack.c.b16 %v426, %v425
  %v433 = vpack.c.b16 %v427, %v427
  %vm439 = vcmask 687104
  %v441 = vsel %vm439, %v390, 0
  %vm443 = vcmask 1041408
  %v445 = vsel %vm443, %v433, 0
  %447 = vmatpush.bf16.msra.mxu0 0
  %448 = vmatpush.bf16.msra.mxu0 0
  %449 = vmatpush.bf16.msra.mxu0 %v445
  %450 = vmatpush.bf16.msra.mxu0 %v432
  %451 = vmatpush.bf16.msra.mxu0 %v431
  %452 = vmatpush.bf16.msra.mxu0 %v430
  %453 = vmatpush.bf16.msra.mxu0 %v429
  %454 = vmatpush.bf16.msra.mxu0 %v428
  %455 = vmatmul.bf16.gmra.mxu0 %v441
  %v456 = vpop.f32.mrf.mxu0
  %v457 = vadd.f32 %v404, %v456
  %v458 = vpop.f32.mrf.mxu0
  %459 = vdwg.mxu0
  %vm460 = vcmask 80896
  %461 = vst.msk [vmem:[%s7] sm:$0xff] %vm460, %v457
  // Predicated region
  $region30: #{lenet5_forward.5} parent=0 // pred_check
    _
  $region31: #{lenet5_forward.5} parent=0 // pred_check_branch
    %463 = sbr.rel (0) target = $region33
  $region32: #{lenet5_forward.5} parent=0 // pred_region
    _
  $region33: #{lenet5_forward.5} parent=0 // pred_fallthru
    _
  // Predicated region
  $region34: #{lenet5_forward.5} parent=0 // pred_check
    _
  $region35: #{lenet5_forward.5} parent=0 // pred_check_branch
    %465 = sbr.rel (0) target = $region37
  $region36: #{lenet5_forward.5} parent=0 // pred_region
    _
  $region37: #{lenet5_forward.5} parent=0 // pred_fallthru
    _

</llo_original>
